<compile_context>
chip_gen: v7x
topology: tpu7x:2x2x1
jax: 0.10.0
libtpu: 0.0.40
codegen_flags: <defaults>
</compile_context>

<pallas_src>
import jax
import jax.numpy as jnp
from jax.experimental import pallas as pl
from jax.experimental.pallas import tpu as pltpu


def _gelu(x):
    # tanh-approx GELU (see note above)
    return jax.nn.gelu(x, approximate=True)


# Order in which weight operands are passed to the fused kernel.
_WEIGHT_KEYS = (
    "enc_w", "enc_b",
    "etl_w1", "etl_b1", "etl_w2", "etl_b2",
    "dc_w1", "dc_b1", "dc_w2", "dc_b2",
    "uc_w1", "uc_b1", "uc_w2", "uc_b2", "uc_w3", "uc_b3",
    "decf_w", "decf_b", "decr_w", "decr_b",
    "dtlf_w1", "dtlf_b1", "dtlf_w2", "dtlf_b2",
    "dtlr_w1", "dtlr_b1", "dtlr_w2", "dtlr_b2",
    "proj_wa", "proj_wb", "proj_b", "ln_g", "ln_b",
    "per_w", "per_b",
)


# ----------------------------------------------------------------------------
# Fused kernel: whole VQ forward (loss pieces + encoder features) in one call.
# ----------------------------------------------------------------------------

def _vq_fused_kernel(
    x_ref, yf_ref, yr_ref, alpha_ref,
    enc_w, enc_b,
    etl_w1, etl_b1, etl_w2, etl_b2,
    dc_w1, dc_b1, dc_w2, dc_b2,
    uc_w1, uc_b1, uc_w2, uc_b2, uc_w3, uc_b3,
    decf_w, decf_b, decr_w, decr_b,
    dtlf_w1, dtlf_b1, dtlf_w2, dtlf_b2,
    dtlr_w1, dtlr_b1, dtlr_w2, dtlr_b2,
    proj_wa, proj_wb, proj_b, ln_g, ln_b,
    per_w, per_b,
    enc_out_ref, ssef_ref, sser_ref,
):
    def lin(h, w, b):
        return jnp.dot(h, w[...], preferred_element_type=jnp.float32) + b[...]

    x = x_ref[...]                                   # [M, T]   (M = B*N rows)

    # encoder stand-in (NeuralTransformer)
    enc_feats = lin(x, enc_w, enc_b)                 # [M, n_embd]
    enc_out_ref[...] = enc_feats

    # encode_task_layer: Linear -> Tanh -> Linear
    to_q = lin(jnp.tanh(lin(enc_feats, etl_w1, etl_b1)), etl_w2, etl_b2)

    # downcast_layer (eval-mode BN folded into the Linears at init time)
    h = _gelu(lin(to_q, dc_w1, dc_b1))
    quantize = jnp.tanh(lin(h, dc_w2, dc_b2))

    # upcast_layer (BN folded likewise)
    h = _gelu(lin(quantize, uc_w1, uc_b1))
    h = _gelu(lin(h, uc_w2, uc_b2))
    upcast = jnp.tanh(lin(h, uc_w3, uc_b3))

    # decoder stand-ins
    dec_f = lin(upcast, decf_w, decf_b)
    dec_r = lin(upcast, decr_w, decr_b)

    # decode_task_layer_freq / raw: Linear -> Tanh -> Linear
    rec_freq = lin(jnp.tanh(lin(dec_f, dtlf_w1, dtlf_b1)), dtlf_w2, dtlf_b2)
    rec_raw = lin(jnp.tanh(lin(dec_r, dtlr_w1, dtlr_b1)), dtlr_w2, dtlr_b2)

    # sigmodule_input_proj without the concat:
    #   cat([upcast, dec_r]) @ W == upcast @ W_a + dec_r @ W_b
    h = (jnp.dot(upcast, proj_wa[...], preferred_element_type=jnp.float32)
         + jnp.dot(dec_r, proj_wb[...], preferred_element_type=jnp.float32)
         + proj_b[...])
    mu = jnp.mean(h, axis=-1, keepdims=True)
    var = jnp.mean((h - mu) * (h - mu), axis=-1, keepdims=True)
    proj = _gelu((h - mu) * jax.lax.rsqrt(var + 1e-5) * ln_g[...] + ln_b[...])

    # periodic decoder stand-in
    periodic = lin(proj, per_w, per_b)

    # final_raw = rec_raw + sigmoid(alpha) * periodic   (sigmoid done in wrapper)
    a = alpha_ref[0]
    final_raw = rec_raw + a * periodic

    # SSE accumulations (divided by element count in the wrapper -> MSE)
    df = rec_freq - yf_ref[...]
    dr = final_raw - yr_ref[...]
    ssef_ref[...] = jnp.sum(df * df, keepdims=True)
    sser_ref[...] = jnp.sum(dr * dr, keepdims=True)


def vq_forward(p, x, y_freq, y_raw):
    """Fused Pallas forward.  x: [B, N, T]; returns (loss, enc_feats, log)."""
    B, N, T = x.shape
    M = B * N
    n_embd = p["enc_w"].shape[1]

    xm = x.reshape(M, T)
    yf = y_freq.reshape(M, y_freq.shape[-1])
    yr = y_raw.reshape(M, y_raw.shape[-1])
    alpha = jax.nn.sigmoid(p["sig_alpha"])           # scalar glue, shape (1,)

    weights = [p[k] for k in _WEIGHT_KEYS]

    vmem = pl.BlockSpec(memory_space=pltpu.MemorySpace.VMEM)
    smem = pl.BlockSpec(memory_space=pltpu.MemorySpace.SMEM)

    enc_feats, sse_f, sse_r = pl.pallas_call(
        _vq_fused_kernel,
        out_shape=(
            jax.ShapeDtypeStruct((M, n_embd), jnp.float32),   # encoder_features
            jax.ShapeDtypeStruct((1, 1), jnp.float32),        # SSE(rec_freq, y_freq)
            jax.ShapeDtypeStruct((1, 1), jnp.float32),        # SSE(final_raw, y_raw)
        ),
        in_specs=[vmem, vmem, vmem, smem] + [vmem] * len(weights),
        out_specs=(vmem, vmem, vmem),
    )(xm, yf, yr, alpha, *weights)

    rec_freq_loss = sse_f[0, 0] / y_freq.size        # F.mse_loss (mean)
    rec_raw_loss = sse_r[0, 0] / y_raw.size
    loss = rec_freq_loss + rec_raw_loss
    log = {"val/rec_freq_loss": rec_freq_loss,
           "val/rec_raw_loss": rec_raw_loss,
           "val/total_loss": loss}
    return loss, enc_feats.reshape(B, N, n_embd), log


# ----------------------------------------------------------------------------
# Parameter init (deterministic, mirrors nn.Linear trunc_normal_(std=0.02), bias=0)
# ----------------------------------------------------------------------------

def _trunc_normal(key, shape, std=0.02):
    return jax.random.truncated_normal(key, -2.0, 2.0, shape, jnp.float32) * std


def init_params(key, *, T, N, n_embd, embed_dim, latent_dim, out_dim):
    ks = iter(jax.random.split(key, 32))
    p = {}

    def lin(d_in, d_out):
        return _trunc_normal(next(ks), (d_in, d_out)), jnp.zeros((1, d_out), jnp.float32)

    # Eval-mode BatchNorm1d(N): running_mean=0, running_var=1, gamma=1, beta=0
    # => a constant scale folded into the preceding Linear (exact).
    bn_s = (1.0 + 1e-5) ** -0.5

    # stand-in NeuralTransformer encoder / decoders, PeriodicTransformerDecoder
    p["enc_w"], p["enc_b"] = lin(T, n_embd)
    p["decf_w"], p["decf_b"] = lin(embed_dim, n_embd)
    p["decr_w"], p["decr_b"] = lin(embed_dim, n_embd)
    p["per_w"], p["per_b"] = lin(out_dim, out_dim)

    # encode_task_layer: Linear(n_embd,n_embd) Tanh Linear(n_embd,embed_dim)
    p["etl_w1"], p["etl_b1"] = lin(n_embd, n_embd)
    p["etl_w2"], p["etl_b2"] = lin(n_embd, embed_dim)

    # downcast_layer (BN folded)
    w, b = lin(embed_dim, 2 * embed_dim)
    p["dc_w1"], p["dc_b1"] = w * bn_s, b * bn_s
    w, b = lin(2 * embed_dim, latent_dim)
    p["dc_w2"], p["dc_b2"] = w * bn_s, b * bn_s

    # upcast_layer (BN folded)
    w, b = lin(latent_dim, 2 * embed_dim)
    p["uc_w1"], p["uc_b1"] = w * bn_s, b * bn_s
    w, b = lin(2 * embed_dim, 2 * embed_dim)
    p["uc_w2"], p["uc_b2"] = w * bn_s, b * bn_s
    w, b = lin(2 * embed_dim, embed_dim)
    p["uc_w3"], p["uc_b3"] = w * bn_s, b * bn_s

    # decode_task_layer_freq / raw
    p["dtlf_w1"], p["dtlf_b1"] = lin(n_embd, n_embd)
    p["dtlf_w2"], p["dtlf_b2"] = lin(n_embd, out_dim // 2)
    p["dtlr_w1"], p["dtlr_b1"] = lin(n_embd, n_embd)
    p["dtlr_w2"], p["dtlr_b2"] = lin(n_embd, out_dim)

    # sigmodule_input_proj: Linear(embed_dim+n_embd, out_dim), LayerNorm, GELU
    # Weight stored pre-split so the kernel avoids the concat.
    proj_w, p["proj_b"] = lin(embed_dim + n_embd, out_dim)
    p["proj_wa"] = proj_w[:embed_dim]
    p["proj_wb"] = proj_w[embed_dim:]
    p["ln_g"] = jnp.ones((1, out_dim), jnp.float32)
    p["ln_b"] = jnp.zeros((1, out_dim), jnp.float32)

    # sigmodule_alpha = zeros(1) - 2.0
    p["sig_alpha"] = jnp.full((1,), -2.0, jnp.float32)
    return p


# ----------------------------------------------------------------------------
# Pure-JAX reference (uses the concat form to check the split-matmul fusion)
# ----------------------------------------------------------------------------

def vq_forward_ref(p, x, y_freq, y_raw):
    def lin(h, w, b):
        return jnp.dot(h, w, preferred_element_type=jnp.float32) + b

    enc_feats = lin(x, p["enc_w"], p["enc_b"])
    to_q = lin(jnp.tanh(lin(enc_feats, p["etl_w1"], p["etl_b1"])), p["etl_w2"], p["etl_b2"])

    h = _gelu(lin(to_q, p["dc_w1"], p["dc_b1"]))
    quantize = jnp.tanh(lin(h, p["dc_w2"], p["dc_b2"]))

    h = _gelu(lin(quantize, p["uc_w1"], p["uc_b1"]))
    h = _gelu(lin(h, p["uc_w2"], p["uc_b2"]))
    upcast = jnp.tanh(lin(h, p["uc_w3"], p["uc_b3"]))

    dec_f = lin(upcast, p["decf_w"], p["decf_b"])
    dec_r = lin(upcast, p["decr_w"], p["decr_b"])
    rec_freq = lin(jnp.tanh(lin(dec_f, p["dtlf_w1"], p["dtlf_b1"])), p["dtlf_w2"], p["dtlf_b2"])
    rec_raw = lin(jnp.tanh(lin(dec_r, p["dtlr_w1"], p["dtlr_b1"])), p["dtlr_w2"], p["dtlr_b2"])

    concat = jnp.concatenate([upcast, dec_r], axis=-1)
    proj_w = jnp.concatenate([p["proj_wa"], p["proj_wb"]], axis=0)
    h = lin(concat, proj_w, p["proj_b"])
    mu = jnp.mean(h, -1, keepdims=True)
    var = jnp.mean((h - mu) ** 2, -1, keepdims=True)
    proj = _gelu(((h - mu) * jax.lax.rsqrt(var + 1e-5)) * p["ln_g"] + p["ln_b"])
    periodic = lin(proj, p["per_w"], p["per_b"])

    alpha = jax.nn.sigmoid(p["sig_alpha"])[0]
    final_raw = rec_raw + alpha * periodic
    rec_freq_loss = jnp.mean((rec_freq - y_freq) ** 2)
    rec_raw_loss = jnp.mean((final_raw - y_raw) ** 2)
    return rec_freq_loss + rec_raw_loss, enc_feats


# ----------------------------------------------------------------------------

if __name__ == "__main__":
    B, N, T = 2, 8, 16            # batch, sequence (electrodes*patches), time-per-patch
    n_embd, embed_dim = 32, 16    # transformer width, quantizer embed dim
    latent_dim, out_dim = 8, 16   # latent dim, decoder_out_dim (freq head = out_dim // 2)

    key = jax.random.PRNGKey(0)
    kx, kf, kr, kp = jax.random.split(key, 4)
    x = jax.random.normal(kx, (B, N, T), jnp.float32)
    y_freq = jax.random.normal(kf, (B, N, out_dim // 2), jnp.float32)
    y_raw = jax.random.normal(kr, (B, N, out_dim), jnp.float32)

    params = init_params(kp, T=T, N=N, n_embd=n_embd, embed_dim=embed_dim,
                         latent_dim=latent_dim, out_dim=out_dim)

    loss, enc_feats, log = jax.jit(vq_forward)(params, x, y_freq, y_raw)
    jax.block_until_ready(loss)

    loss_ref, enc_ref = vq_forward_ref(params, x, y_freq, y_raw)
    assert jnp.allclose(loss, loss_ref, rtol=1e-3, atol=1e-3), (loss, loss_ref)
    assert jnp.allclose(enc_feats, enc_ref, rtol=1e-3, atol=1e-3)
    assert bool(jnp.isfinite(loss))

    print("KERNEL_OK")
</pallas_src>

<mosaic_0001>
module attributes {stable_mosaic.version = 11 : i64} {
  func.func @_vq_fused_kernel(%arg0: memref<16x16xf32, #tpu.memory_space<vmem>>, %arg1: memref<16x8xf32, #tpu.memory_space<vmem>>, %arg2: memref<16x16xf32, #tpu.memory_space<vmem>>, %arg3: memref<1xf32, #tpu.memory_space<smem>>, %arg4: memref<16x32xf32, #tpu.memory_space<vmem>>, %arg5: memref<1x32xf32, #tpu.memory_space<vmem>>, %arg6: memref<32x32xf32, #tpu.memory_space<vmem>>, %arg7: memref<1x32xf32, #tpu.memory_space<vmem>>, %arg8: memref<32x16xf32, #tpu.memory_space<vmem>>, %arg9: memref<1x16xf32, #tpu.memory_space<vmem>>, %arg10: memref<16x32xf32, #tpu.memory_space<vmem>>, %arg11: memref<1x32xf32, #tpu.memory_space<vmem>>, %arg12: memref<32x8xf32, #tpu.memory_space<vmem>>, %arg13: memref<1x8xf32, #tpu.memory_space<vmem>>, %arg14: memref<8x32xf32, #tpu.memory_space<vmem>>, %arg15: memref<1x32xf32, #tpu.memory_space<vmem>>, %arg16: memref<32x32xf32, #tpu.memory_space<vmem>>, %arg17: memref<1x32xf32, #tpu.memory_space<vmem>>, %arg18: memref<32x16xf32, #tpu.memory_space<vmem>>, %arg19: memref<1x16xf32, #tpu.memory_space<vmem>>, %arg20: memref<16x32xf32, #tpu.memory_space<vmem>>, %arg21: memref<1x32xf32, #tpu.memory_space<vmem>>, %arg22: memref<16x32xf32, #tpu.memory_space<vmem>>, %arg23: memref<1x32xf32, #tpu.memory_space<vmem>>, %arg24: memref<32x32xf32, #tpu.memory_space<vmem>>, %arg25: memref<1x32xf32, #tpu.memory_space<vmem>>, %arg26: memref<32x8xf32, #tpu.memory_space<vmem>>, %arg27: memref<1x8xf32, #tpu.memory_space<vmem>>, %arg28: memref<32x32xf32, #tpu.memory_space<vmem>>, %arg29: memref<1x32xf32, #tpu.memory_space<vmem>>, %arg30: memref<32x16xf32, #tpu.memory_space<vmem>>, %arg31: memref<1x16xf32, #tpu.memory_space<vmem>>, %arg32: memref<16x16xf32, #tpu.memory_space<vmem>>, %arg33: memref<32x16xf32, #tpu.memory_space<vmem>>, %arg34: memref<1x16xf32, #tpu.memory_space<vmem>>, %arg35: memref<1x16xf32, #tpu.memory_space<vmem>>, %arg36: memref<1x16xf32, #tpu.memory_space<vmem>>, %arg37: memref<16x16xf32, #tpu.memory_space<vmem>>, %arg38: memref<1x16xf32, #tpu.memory_space<vmem>>, %arg39: memref<16x32xf32, #tpu.memory_space<vmem>>, %arg40: memref<1x1xf32, #tpu.memory_space<vmem>>, %arg41: memref<1x1xf32, #tpu.memory_space<vmem>>) attributes {dimension_semantics = [], scalar_prefetch = 0 : i64, scratch_operands = 0 : i64, tpu.core_type = #tpu.core_type<tc>} {
    %c0 = arith.constant 0 : index
    %c0_0 = arith.constant 0 : index
    %0 = vector.load %arg0[%c0, %c0_0] : memref<16x16xf32, #tpu.memory_space<vmem>>, vector<16x16xf32>
    %c0_1 = arith.constant 0 : index
    %c0_2 = arith.constant 0 : index
    %1 = vector.load %arg4[%c0_1, %c0_2] : memref<16x32xf32, #tpu.memory_space<vmem>>, vector<16x32xf32>
    %cst = arith.constant dense<0.000000e+00> : vector<16x32xf32>
    %2 = tpu.matmul %0, %1, %cst {dimension_numbers = #tpu.dot_dimension_numbers<[1], [0], [0], [1], [0, 0, 1, 1], [], []>} : vector<16x16xf32>, vector<16x32xf32>, vector<16x32xf32> -> vector<16x32xf32>
    %c0_3 = arith.constant 0 : index
    %c0_4 = arith.constant 0 : index
    %3 = vector.load %arg5[%c0_3, %c0_4] : memref<1x32xf32, #tpu.memory_space<vmem>>, vector<1x32xf32>
    %4 = vector.broadcast %3 : vector<1x32xf32> to vector<16x32xf32>
    %5 = arith.addf %2, %4 : vector<16x32xf32>
    %c0_5 = arith.constant 0 : index
    %c0_6 = arith.constant 0 : index
    %6 = vector.load %arg39[%c0_5, %c0_6] : memref<16x32xf32, #tpu.memory_space<vmem>>, vector<16x32xf32>
    tpu.vector_store %arg39[%c0_5, %c0_6], %5 {strides = array<i32>} : memref<16x32xf32, #tpu.memory_space<vmem>>, vector<16x32xf32>,
    %c0_7 = arith.constant 0 : index
    %c0_8 = arith.constant 0 : index
    %7 = vector.load %arg6[%c0_7, %c0_8] : memref<32x32xf32, #tpu.memory_space<vmem>>, vector<32x32xf32>
    %cst_9 = arith.constant dense<0.000000e+00> : vector<16x32xf32>
    %8 = tpu.matmul %5, %7, %cst_9 {dimension_numbers = #tpu.dot_dimension_numbers<[1], [0], [0], [1], [0, 0, 1, 1], [], []>} : vector<16x32xf32>, vector<32x32xf32>, vector<16x32xf32> -> vector<16x32xf32>
    %c0_10 = arith.constant 0 : index
    %c0_11 = arith.constant 0 : index
    %9 = vector.load %arg7[%c0_10, %c0_11] : memref<1x32xf32, #tpu.memory_space<vmem>>, vector<1x32xf32>
    %10 = vector.broadcast %9 : vector<1x32xf32> to vector<16x32xf32>
    %11 = arith.addf %8, %10 : vector<16x32xf32>
    %12 = math.tanh %11 : vector<16x32xf32>
    %c0_12 = arith.constant 0 : index
    %c0_13 = arith.constant 0 : index
    %13 = vector.load %arg8[%c0_12, %c0_13] : memref<32x16xf32, #tpu.memory_space<vmem>>, vector<32x16xf32>
    %cst_14 = arith.constant dense<0.000000e+00> : vector<16x16xf32>
    %14 = tpu.matmul %12, %13, %cst_14 {dimension_numbers = #tpu.dot_dimension_numbers<[1], [0], [0], [1], [0, 0, 1, 1], [], []>} : vector<16x32xf32>, vector<32x16xf32>, vector<16x16xf32> -> vector<16x16xf32>
    %c0_15 = arith.constant 0 : index
    %c0_16 = arith.constant 0 : index
    %15 = vector.load %arg9[%c0_15, %c0_16] : memref<1x16xf32, #tpu.memory_space<vmem>>, vector<1x16xf32>
    %16 = vector.broadcast %15 : vector<1x16xf32> to vector<16x16xf32>
    %17 = arith.addf %14, %16 : vector<16x16xf32>
    %c0_17 = arith.constant 0 : index
    %c0_18 = arith.constant 0 : index
    %18 = vector.load %arg10[%c0_17, %c0_18] : memref<16x32xf32, #tpu.memory_space<vmem>>, vector<16x32xf32>
    %cst_19 = arith.constant dense<0.000000e+00> : vector<16x32xf32>
    %19 = tpu.matmul %17, %18, %cst_19 {dimension_numbers = #tpu.dot_dimension_numbers<[1], [0], [0], [1], [0, 0, 1, 1], [], []>} : vector<16x16xf32>, vector<16x32xf32>, vector<16x32xf32> -> vector<16x32xf32>
    %c0_20 = arith.constant 0 : index
    %c0_21 = arith.constant 0 : index
    %20 = vector.load %arg11[%c0_20, %c0_21] : memref<1x32xf32, #tpu.memory_space<vmem>>, vector<1x32xf32>
    %21 = vector.broadcast %20 : vector<1x32xf32> to vector<16x32xf32>
    %22 = arith.addf %19, %21 : vector<16x32xf32>
    %23 = arith.mulf %22, %22 : vector<16x32xf32>
    %24 = arith.mulf %22, %23 : vector<16x32xf32>
    %cst_22 = arith.constant 4.471500e-02 : f32
    %25 = vector.broadcast %cst_22 : f32 to vector<16x32xf32>
    %26 = arith.mulf %25, %24 : vector<16x32xf32>
    %27 = arith.addf %22, %26 : vector<16x32xf32>
    %cst_23 = arith.constant 0.797884583 : f32
    %28 = vector.broadcast %cst_23 : f32 to vector<16x32xf32>
    %29 = arith.mulf %28, %27 : vector<16x32xf32>
    %30 = math.tanh %29 : vector<16x32xf32>
    %cst_24 = arith.constant 1.000000e+00 : f32
    %31 = vector.broadcast %cst_24 : f32 to vector<16x32xf32>
    %32 = arith.addf %31, %30 : vector<16x32xf32>
    %cst_25 = arith.constant 5.000000e-01 : f32
    %33 = vector.broadcast %cst_25 : f32 to vector<16x32xf32>
    %34 = arith.mulf %33, %32 : vector<16x32xf32>
    %35 = arith.mulf %22, %34 : vector<16x32xf32>
    %c0_26 = arith.constant 0 : index
    %c0_27 = arith.constant 0 : index
    %36 = vector.load %arg12[%c0_26, %c0_27] : memref<32x8xf32, #tpu.memory_space<vmem>>, vector<32x8xf32>
    %cst_28 = arith.constant dense<0.000000e+00> : vector<16x8xf32>
    %37 = tpu.matmul %35, %36, %cst_28 {dimension_numbers = #tpu.dot_dimension_numbers<[1], [0], [0], [1], [0, 0, 1, 1], [], []>} : vector<16x32xf32>, vector<32x8xf32>, vector<16x8xf32> -> vector<16x8xf32>
    %c0_29 = arith.constant 0 : index
    %c0_30 = arith.constant 0 : index
    %38 = vector.load %arg13[%c0_29, %c0_30] : memref<1x8xf32, #tpu.memory_space<vmem>>, vector<1x8xf32>
    %39 = vector.broadcast %38 : vector<1x8xf32> to vector<16x8xf32>
    %40 = arith.addf %37, %39 : vector<16x8xf32>
    %41 = math.tanh %40 : vector<16x8xf32>
    %c0_31 = arith.constant 0 : index
    %c0_32 = arith.constant 0 : index
    %42 = vector.load %arg14[%c0_31, %c0_32] : memref<8x32xf32, #tpu.memory_space<vmem>>, vector<8x32xf32>
    %cst_33 = arith.constant dense<0.000000e+00> : vector<16x32xf32>
    %43 = tpu.matmul %41, %42, %cst_33 {dimension_numbers = #tpu.dot_dimension_numbers<[1], [0], [0], [1], [0, 0, 1, 1], [], []>} : vector<16x8xf32>, vector<8x32xf32>, vector<16x32xf32> -> vector<16x32xf32>
    %c0_34 = arith.constant 0 : index
    %c0_35 = arith.constant 0 : index
    %44 = vector.load %arg15[%c0_34, %c0_35] : memref<1x32xf32, #tpu.memory_space<vmem>>, vector<1x32xf32>
    %45 = vector.broadcast %44 : vector<1x32xf32> to vector<16x32xf32>
    %46 = arith.addf %43, %45 : vector<16x32xf32>
    %47 = arith.mulf %46, %46 : vector<16x32xf32>
    %48 = arith.mulf %46, %47 : vector<16x32xf32>
    %cst_36 = arith.constant 4.471500e-02 : f32
    %49 = vector.broadcast %cst_36 : f32 to vector<16x32xf32>
    %50 = arith.mulf %49, %48 : vector<16x32xf32>
    %51 = arith.addf %46, %50 : vector<16x32xf32>
    %cst_37 = arith.constant 0.797884583 : f32
    %52 = vector.broadcast %cst_37 : f32 to vector<16x32xf32>
    %53 = arith.mulf %52, %51 : vector<16x32xf32>
    %54 = math.tanh %53 : vector<16x32xf32>
    %cst_38 = arith.constant 1.000000e+00 : f32
    %55 = vector.broadcast %cst_38 : f32 to vector<16x32xf32>
    %56 = arith.addf %55, %54 : vector<16x32xf32>
    %cst_39 = arith.constant 5.000000e-01 : f32
    %57 = vector.broadcast %cst_39 : f32 to vector<16x32xf32>
    %58 = arith.mulf %57, %56 : vector<16x32xf32>
    %59 = arith.mulf %46, %58 : vector<16x32xf32>
    %c0_40 = arith.constant 0 : index
    %c0_41 = arith.constant 0 : index
    %60 = vector.load %arg16[%c0_40, %c0_41] : memref<32x32xf32, #tpu.memory_space<vmem>>, vector<32x32xf32>
    %cst_42 = arith.constant dense<0.000000e+00> : vector<16x32xf32>
    %61 = tpu.matmul %59, %60, %cst_42 {dimension_numbers = #tpu.dot_dimension_numbers<[1], [0], [0], [1], [0, 0, 1, 1], [], []>} : vector<16x32xf32>, vector<32x32xf32>, vector<16x32xf32> -> vector<16x32xf32>
    %c0_43 = arith.constant 0 : index
    %c0_44 = arith.constant 0 : index
    %62 = vector.load %arg17[%c0_43, %c0_44] : memref<1x32xf32, #tpu.memory_space<vmem>>, vector<1x32xf32>
    %63 = vector.broadcast %62 : vector<1x32xf32> to vector<16x32xf32>
    %64 = arith.addf %61, %63 : vector<16x32xf32>
    %65 = arith.mulf %64, %64 : vector<16x32xf32>
    %66 = arith.mulf %64, %65 : vector<16x32xf32>
    %cst_45 = arith.constant 4.471500e-02 : f32
    %67 = vector.broadcast %cst_45 : f32 to vector<16x32xf32>
    %68 = arith.mulf %67, %66 : vector<16x32xf32>
    %69 = arith.addf %64, %68 : vector<16x32xf32>
    %cst_46 = arith.constant 0.797884583 : f32
    %70 = vector.broadcast %cst_46 : f32 to vector<16x32xf32>
    %71 = arith.mulf %70, %69 : vector<16x32xf32>
    %72 = math.tanh %71 : vector<16x32xf32>
    %cst_47 = arith.constant 1.000000e+00 : f32
    %73 = vector.broadcast %cst_47 : f32 to vector<16x32xf32>
    %74 = arith.addf %73, %72 : vector<16x32xf32>
    %cst_48 = arith.constant 5.000000e-01 : f32
    %75 = vector.broadcast %cst_48 : f32 to vector<16x32xf32>
    %76 = arith.mulf %75, %74 : vector<16x32xf32>
    %77 = arith.mulf %64, %76 : vector<16x32xf32>
    %c0_49 = arith.constant 0 : index
    %c0_50 = arith.constant 0 : index
    %78 = vector.load %arg18[%c0_49, %c0_50] : memref<32x16xf32, #tpu.memory_space<vmem>>, vector<32x16xf32>
    %cst_51 = arith.constant dense<0.000000e+00> : vector<16x16xf32>
    %79 = tpu.matmul %77, %78, %cst_51 {dimension_numbers = #tpu.dot_dimension_numbers<[1], [0], [0], [1], [0, 0, 1, 1], [], []>} : vector<16x32xf32>, vector<32x16xf32>, vector<16x16xf32> -> vector<16x16xf32>
    %c0_52 = arith.constant 0 : index
    %c0_53 = arith.constant 0 : index
    %80 = vector.load %arg19[%c0_52, %c0_53] : memref<1x16xf32, #tpu.memory_space<vmem>>, vector<1x16xf32>
    %81 = vector.broadcast %80 : vector<1x16xf32> to vector<16x16xf32>
    %82 = arith.addf %79, %81 : vector<16x16xf32>
    %83 = math.tanh %82 : vector<16x16xf32>
    %c0_54 = arith.constant 0 : index
    %c0_55 = arith.constant 0 : index
    %84 = vector.load %arg20[%c0_54, %c0_55] : memref<16x32xf32, #tpu.memory_space<vmem>>, vector<16x32xf32>
    %cst_56 = arith.constant dense<0.000000e+00> : vector<16x32xf32>
    %85 = tpu.matmul %83, %84, %cst_56 {dimension_numbers = #tpu.dot_dimension_numbers<[1], [0], [0], [1], [0, 0, 1, 1], [], []>} : vector<16x16xf32>, vector<16x32xf32>, vector<16x32xf32> -> vector<16x32xf32>
    %c0_57 = arith.constant 0 : index
    %c0_58 = arith.constant 0 : index
    %86 = vector.load %arg21[%c0_57, %c0_58] : memref<1x32xf32, #tpu.memory_space<vmem>>, vector<1x32xf32>
    %87 = vector.broadcast %86 : vector<1x32xf32> to vector<16x32xf32>
    %88 = arith.addf %85, %87 : vector<16x32xf32>
    %c0_59 = arith.constant 0 : index
    %c0_60 = arith.constant 0 : index
    %89 = vector.load %arg22[%c0_59, %c0_60] : memref<16x32xf32, #tpu.memory_space<vmem>>, vector<16x32xf32>
    %cst_61 = arith.constant dense<0.000000e+00> : vector<16x32xf32>
    %90 = tpu.matmul %83, %89, %cst_61 {dimension_numbers = #tpu.dot_dimension_numbers<[1], [0], [0], [1], [0, 0, 1, 1], [], []>} : vector<16x16xf32>, vector<16x32xf32>, vector<16x32xf32> -> vector<16x32xf32>
    %c0_62 = arith.constant 0 : index
    %c0_63 = arith.constant 0 : index
    %91 = vector.load %arg23[%c0_62, %c0_63] : memref<1x32xf32, #tpu.memory_space<vmem>>, vector<1x32xf32>
    %92 = vector.broadcast %91 : vector<1x32xf32> to vector<16x32xf32>
    %93 = arith.addf %90, %92 : vector<16x32xf32>
    %c0_64 = arith.constant 0 : index
    %c0_65 = arith.constant 0 : index
    %94 = vector.load %arg24[%c0_64, %c0_65] : memref<32x32xf32, #tpu.memory_space<vmem>>, vector<32x32xf32>
    %cst_66 = arith.constant dense<0.000000e+00> : vector<16x32xf32>
    %95 = tpu.matmul %88, %94, %cst_66 {dimension_numbers = #tpu.dot_dimension_numbers<[1], [0], [0], [1], [0, 0, 1, 1], [], []>} : vector<16x32xf32>, vector<32x32xf32>, vector<16x32xf32> -> vector<16x32xf32>
    %c0_67 = arith.constant 0 : index
    %c0_68 = arith.constant 0 : index
    %96 = vector.load %arg25[%c0_67, %c0_68] : memref<1x32xf32, #tpu.memory_space<vmem>>, vector<1x32xf32>
    %97 = vector.broadcast %96 : vector<1x32xf32> to vector<16x32xf32>
    %98 = arith.addf %95, %97 : vector<16x32xf32>
    %99 = math.tanh %98 : vector<16x32xf32>
    %c0_69 = arith.constant 0 : index
    %c0_70 = arith.constant 0 : index
    %100 = vector.load %arg26[%c0_69, %c0_70] : memref<32x8xf32, #tpu.memory_space<vmem>>, vector<32x8xf32>
    %cst_71 = arith.constant dense<0.000000e+00> : vector<16x8xf32>
    %101 = tpu.matmul %99, %100, %cst_71 {dimension_numbers = #tpu.dot_dimension_numbers<[1], [0], [0], [1], [0, 0, 1, 1], [], []>} : vector<16x32xf32>, vector<32x8xf32>, vector<16x8xf32> -> vector<16x8xf32>
    %c0_72 = arith.constant 0 : index
    %c0_73 = arith.constant 0 : index
    %102 = vector.load %arg27[%c0_72, %c0_73] : memref<1x8xf32, #tpu.memory_space<vmem>>, vector<1x8xf32>
    %103 = vector.broadcast %102 : vector<1x8xf32> to vector<16x8xf32>
    %104 = arith.addf %101, %103 : vector<16x8xf32>
    %c0_74 = arith.constant 0 : index
    %c0_75 = arith.constant 0 : index
    %105 = vector.load %arg28[%c0_74, %c0_75] : memref<32x32xf32, #tpu.memory_space<vmem>>, vector<32x32xf32>
    %cst_76 = arith.constant dense<0.000000e+00> : vector<16x32xf32>
    %106 = tpu.matmul %93, %105, %cst_76 {dimension_numbers = #tpu.dot_dimension_numbers<[1], [0], [0], [1], [0, 0, 1, 1], [], []>} : vector<16x32xf32>, vector<32x32xf32>, vector<16x32xf32> -> vector<16x32xf32>
    %c0_77 = arith.constant 0 : index
    %c0_78 = arith.constant 0 : index
    %107 = vector.load %arg29[%c0_77, %c0_78] : memref<1x32xf32, #tpu.memory_space<vmem>>, vector<1x32xf32>
    %108 = vector.broadcast %107 : vector<1x32xf32> to vector<16x32xf32>
    %109 = arith.addf %106, %108 : vector<16x32xf32>
    %110 = math.tanh %109 : vector<16x32xf32>
    %c0_79 = arith.constant 0 : index
    %c0_80 = arith.constant 0 : index
    %111 = vector.load %arg30[%c0_79, %c0_80] : memref<32x16xf32, #tpu.memory_space<vmem>>, vector<32x16xf32>
    %cst_81 = arith.constant dense<0.000000e+00> : vector<16x16xf32>
    %112 = tpu.matmul %110, %111, %cst_81 {dimension_numbers = #tpu.dot_dimension_numbers<[1], [0], [0], [1], [0, 0, 1, 1], [], []>} : vector<16x32xf32>, vector<32x16xf32>, vector<16x16xf32> -> vector<16x16xf32>
    %c0_82 = arith.constant 0 : index
    %c0_83 = arith.constant 0 : index
    %113 = vector.load %arg31[%c0_82, %c0_83] : memref<1x16xf32, #tpu.memory_space<vmem>>, vector<1x16xf32>
    %114 = vector.broadcast %113 : vector<1x16xf32> to vector<16x16xf32>
    %115 = arith.addf %112, %114 : vector<16x16xf32>
    %c0_84 = arith.constant 0 : index
    %c0_85 = arith.constant 0 : index
    %116 = vector.load %arg32[%c0_84, %c0_85] : memref<16x16xf32, #tpu.memory_space<vmem>>, vector<16x16xf32>
    %cst_86 = arith.constant dense<0.000000e+00> : vector<16x16xf32>
    %117 = tpu.matmul %83, %116, %cst_86 {dimension_numbers = #tpu.dot_dimension_numbers<[1], [0], [0], [1], [0, 0, 1, 1], [], []>} : vector<16x16xf32>, vector<16x16xf32>, vector<16x16xf32> -> vector<16x16xf32>
    %c0_87 = arith.constant 0 : index
    %c0_88 = arith.constant 0 : index
    %118 = vector.load %arg33[%c0_87, %c0_88] : memref<32x16xf32, #tpu.memory_space<vmem>>, vector<32x16xf32>
    %cst_89 = arith.constant dense<0.000000e+00> : vector<16x16xf32>
    %119 = tpu.matmul %93, %118, %cst_89 {dimension_numbers = #tpu.dot_dimension_numbers<[1], [0], [0], [1], [0, 0, 1, 1], [], []>} : vector<16x32xf32>, vector<32x16xf32>, vector<16x16xf32> -> vector<16x16xf32>
    %120 = arith.addf %117, %119 : vector<16x16xf32>
    %c0_90 = arith.constant 0 : index
    %c0_91 = arith.constant 0 : index
    %121 = vector.load %arg34[%c0_90, %c0_91] : memref<1x16xf32, #tpu.memory_space<vmem>>, vector<1x16xf32>
    %122 = vector.broadcast %121 : vector<1x16xf32> to vector<16x16xf32>
    %123 = arith.addf %120, %122 : vector<16x16xf32>
    %cst_92 = arith.constant dense<0.000000e+00> : vector<16xf32>
    %124 = vector.multi_reduction <add>, %123, %cst_92 [1] : vector<16x16xf32> to vector<16xf32>
    %125 = vector.shape_cast %124 : vector<16xf32> to vector<16x1xf32>
    %cst_93 = arith.constant 1.600000e+01 : f32
    %126 = vector.broadcast %cst_93 : f32 to vector<16x1xf32>
    %127 = arith.divf %125, %126 : vector<16x1xf32>
    %128 = vector.broadcast %127 : vector<16x1xf32> to vector<16x16xf32>
    %129 = arith.subf %123, %128 : vector<16x16xf32>
    %130 = vector.broadcast %127 : vector<16x1xf32> to vector<16x16xf32>
    %131 = arith.subf %123, %130 : vector<16x16xf32>
    %132 = arith.mulf %129, %131 : vector<16x16xf32>
    %cst_94 = arith.constant dense<0.000000e+00> : vector<16xf32>
    %133 = vector.multi_reduction <add>, %132, %cst_94 [1] : vector<16x16xf32> to vector<16xf32>
    %134 = vector.shape_cast %133 : vector<16xf32> to vector<16x1xf32>
    %cst_95 = arith.constant 1.600000e+01 : f32
    %135 = vector.broadcast %cst_95 : f32 to vector<16x1xf32>
    %136 = arith.divf %134, %135 : vector<16x1xf32>
    %137 = vector.broadcast %127 : vector<16x1xf32> to vector<16x16xf32>
    %138 = arith.subf %123, %137 : vector<16x16xf32>
    %cst_96 = arith.constant 9.99999974E-6 : f32
    %139 = vector.broadcast %cst_96 : f32 to vector<16x1xf32>
    %140 = arith.addf %136, %139 : vector<16x1xf32>
    %141 = math.rsqrt %140 : vector<16x1xf32>
    %142 = vector.broadcast %141 : vector<16x1xf32> to vector<16x16xf32>
    %143 = arith.mulf %138, %142 : vector<16x16xf32>
    %c0_97 = arith.constant 0 : index
    %c0_98 = arith.constant 0 : index
    %144 = vector.load %arg35[%c0_97, %c0_98] : memref<1x16xf32, #tpu.memory_space<vmem>>, vector<1x16xf32>
    %145 = vector.broadcast %144 : vector<1x16xf32> to vector<16x16xf32>
    %146 = arith.mulf %143, %145 : vector<16x16xf32>
    %c0_99 = arith.constant 0 : index
    %c0_100 = arith.constant 0 : index
    %147 = vector.load %arg36[%c0_99, %c0_100] : memref<1x16xf32, #tpu.memory_space<vmem>>, vector<1x16xf32>
    %148 = vector.broadcast %147 : vector<1x16xf32> to vector<16x16xf32>
    %149 = arith.addf %146, %148 : vector<16x16xf32>
    %150 = arith.mulf %149, %149 : vector<16x16xf32>
    %151 = arith.mulf %149, %150 : vector<16x16xf32>
    %cst_101 = arith.constant 4.471500e-02 : f32
    %152 = vector.broadcast %cst_101 : f32 to vector<16x16xf32>
    %153 = arith.mulf %152, %151 : vector<16x16xf32>
    %154 = arith.addf %149, %153 : vector<16x16xf32>
    %cst_102 = arith.constant 0.797884583 : f32
    %155 = vector.broadcast %cst_102 : f32 to vector<16x16xf32>
    %156 = arith.mulf %155, %154 : vector<16x16xf32>
    %157 = math.tanh %156 : vector<16x16xf32>
    %cst_103 = arith.constant 1.000000e+00 : f32
    %158 = vector.broadcast %cst_103 : f32 to vector<16x16xf32>
    %159 = arith.addf %158, %157 : vector<16x16xf32>
    %cst_104 = arith.constant 5.000000e-01 : f32
    %160 = vector.broadcast %cst_104 : f32 to vector<16x16xf32>
    %161 = arith.mulf %160, %159 : vector<16x16xf32>
    %162 = arith.mulf %149, %161 : vector<16x16xf32>
    %c0_105 = arith.constant 0 : index
    %c0_106 = arith.constant 0 : index
    %163 = vector.load %arg37[%c0_105, %c0_106] : memref<16x16xf32, #tpu.memory_space<vmem>>, vector<16x16xf32>
    %cst_107 = arith.constant dense<0.000000e+00> : vector<16x16xf32>
    %164 = tpu.matmul %162, %163, %cst_107 {dimension_numbers = #tpu.dot_dimension_numbers<[1], [0], [0], [1], [0, 0, 1, 1], [], []>} : vector<16x16xf32>, vector<16x16xf32>, vector<16x16xf32> -> vector<16x16xf32>
    %c0_108 = arith.constant 0 : index
    %c0_109 = arith.constant 0 : index
    %165 = vector.load %arg38[%c0_108, %c0_109] : memref<1x16xf32, #tpu.memory_space<vmem>>, vector<1x16xf32>
    %166 = vector.broadcast %165 : vector<1x16xf32> to vector<16x16xf32>
    %167 = arith.addf %164, %166 : vector<16x16xf32>
    %c0_110 = arith.constant 0 : index
    %168 = memref.load %arg3[%c0_110] : memref<1xf32, #tpu.memory_space<smem>>
    %169 = vector.broadcast %168 : f32 to vector<16x16xf32>
    %170 = arith.mulf %169, %167 : vector<16x16xf32>
    %171 = arith.addf %115, %170 : vector<16x16xf32>
    %c0_111 = arith.constant 0 : index
    %c0_112 = arith.constant 0 : index
    %172 = vector.load %arg1[%c0_111, %c0_112] : memref<16x8xf32, #tpu.memory_space<vmem>>, vector<16x8xf32>
    %173 = arith.subf %104, %172 : vector<16x8xf32>
    %c0_113 = arith.constant 0 : index
    %c0_114 = arith.constant 0 : index
    %174 = vector.load %arg2[%c0_113, %c0_114] : memref<16x16xf32, #tpu.memory_space<vmem>>, vector<16x16xf32>
    %175 = arith.subf %171, %174 : vector<16x16xf32>
    %176 = arith.mulf %173, %173 : vector<16x8xf32>
    %177 = vector.shape_cast %176 : vector<16x8xf32> to vector<1x16x8xf32>
    %cst_115 = arith.constant dense<0.000000e+00> : vector<1xf32>
    %178 = vector.multi_reduction <add>, %177, %cst_115 [1, 2] : vector<1x16x8xf32> to vector<1xf32>
    %179 = vector.shape_cast %178 : vector<1xf32> to vector<1x1x1xf32>
    %180 = vector.extract %179[0, 0, 0] : f32 from vector<1x1x1xf32>
    %181 = vector.broadcast %180 : f32 to vector<1x1xf32>
    %c0_116 = arith.constant 0 : index
    %c0_117 = arith.constant 0 : index
    %182 = vector.load %arg40[%c0_116, %c0_117] : memref<1x1xf32, #tpu.memory_space<vmem>>, vector<1x1xf32>
    tpu.vector_store %arg40[%c0_116, %c0_117], %181 {strides = array<i32>} : memref<1x1xf32, #tpu.memory_space<vmem>>, vector<1x1xf32>,
    %183 = arith.mulf %175, %175 : vector<16x16xf32>
    %184 = vector.shape_cast %183 : vector<16x16xf32> to vector<1x16x16xf32>
    %cst_118 = arith.constant dense<0.000000e+00> : vector<1xf32>
    %185 = vector.multi_reduction <add>, %184, %cst_118 [1, 2] : vector<1x16x16xf32> to vector<1xf32>
    %186 = vector.shape_cast %185 : vector<1xf32> to vector<1x1x1xf32>
    %187 = vector.extract %186[0, 0, 0] : f32 from vector<1x1x1xf32>
    %188 = vector.broadcast %187 : f32 to vector<1x1xf32>
    %c0_119 = arith.constant 0 : index
    %c0_120 = arith.constant 0 : index
    %189 = vector.load %arg41[%c0_119, %c0_120] : memref<1x1xf32, #tpu.memory_space<vmem>>, vector<1x1xf32>
    tpu.vector_store %arg41[%c0_119, %c0_120], %188 {strides = array<i32>} : memref<1x1xf32, #tpu.memory_space<vmem>>, vector<1x1xf32>,
    return
  }
}

</mosaic_0001>

<llo_original>
// kernel: vq_forward.1
$region0: #{vq_forward.1}
  #allocation0 [shape = 'u32[]', space=smem, size = 0x4, offset = 0x4, fixed_abs, tag = 'smem constant byte address 0x4 - core index']
  #allocation1 [shape = 'u32[144,128]{1,0:T(1,128)}', space=vmem, size = 0x12000, scoped, tag = 'internal scratch']
  #allocation2 [shape = 'f32[1]{0:T(128)S(6)}', space=smem, size = 0x200, scoped, tag = 'scoped memory for vq_forward.1']
  %s0 = inlined_call_operand.smem [shape: u32[42], index: -1, kind: input, shape index: {}]
  %s1 = sld [smem:[%s0]]
  %s2 = scalar_lea.smem %s0, 1
  %s3 = sld [smem:[%s2]]
  %s4 = scalar_lea.smem %s0, 2
  %s5 = sld [smem:[%s4]]
  %s6 = scalar_lea.smem %s0, 3
  %s7 = sld [smem:[%s6]]
  %s8 = scalar_lea.smem %s0, 4
  %s9 = sld [smem:[%s8]]
  %s10 = scalar_lea.smem %s0, 5
  %s11 = sld [smem:[%s10]]
  %s12 = scalar_lea.smem %s0, 6
  %s13 = sld [smem:[%s12]]
  %s14 = scalar_lea.smem %s0, 7
  %s15 = sld [smem:[%s14]]
  %s16 = scalar_lea.smem %s0, 8
  %s17 = sld [smem:[%s16]]
  %s18 = scalar_lea.smem %s0, 9
  %s19 = sld [smem:[%s18]]
  %s20 = scalar_lea.smem %s0, 10
  %s21 = sld [smem:[%s20]]
  %s22 = scalar_lea.smem %s0, 11
  %s23 = sld [smem:[%s22]]
  %s24 = scalar_lea.smem %s0, 12
  %s25 = sld [smem:[%s24]]
  %s26 = scalar_lea.smem %s0, 13
  %s27 = sld [smem:[%s26]]
  %s28 = scalar_lea.smem %s0, 14
  %s29 = sld [smem:[%s28]]
  %s30 = scalar_lea.smem %s0, 15
  %s31 = sld [smem:[%s30]]
  %s32 = scalar_lea.smem %s0, 16
  %s33 = sld [smem:[%s32]]
  %s34 = scalar_lea.smem %s0, 17
  %s35 = sld [smem:[%s34]]
  %s36 = scalar_lea.smem %s0, 18
  %s37 = sld [smem:[%s36]]
  %s38 = scalar_lea.smem %s0, 19
  %s39 = sld [smem:[%s38]]
  %s40 = scalar_lea.smem %s0, 20
  %s41 = sld [smem:[%s40]]
  %s42 = scalar_lea.smem %s0, 21
  %s43 = sld [smem:[%s42]]
  %s44 = scalar_lea.smem %s0, 22
  %s45 = sld [smem:[%s44]]
  %s46 = scalar_lea.smem %s0, 23
  %s47 = sld [smem:[%s46]]
  %s48 = scalar_lea.smem %s0, 24
  %s49 = sld [smem:[%s48]]
  %s50 = scalar_lea.smem %s0, 25
  %s51 = sld [smem:[%s50]]
  %s52 = scalar_lea.smem %s0, 26
  %s53 = sld [smem:[%s52]]
  %s54 = scalar_lea.smem %s0, 27
  %s55 = sld [smem:[%s54]]
  %s56 = scalar_lea.smem %s0, 28
  %s57 = sld [smem:[%s56]]
  %s58 = scalar_lea.smem %s0, 29
  %s59 = sld [smem:[%s58]]
  %s60 = scalar_lea.smem %s0, 30
  %s61 = sld [smem:[%s60]]
  %s62 = scalar_lea.smem %s0, 31
  %s63 = sld [smem:[%s62]]
  %s64 = scalar_lea.smem %s0, 32
  %s65 = sld [smem:[%s64]]
  %s66 = scalar_lea.smem %s0, 33
  %s67 = sld [smem:[%s66]]
  %s68 = scalar_lea.smem %s0, 34
  %s69 = sld [smem:[%s68]]
  %s70 = scalar_lea.smem %s0, 35
  %s71 = sld [smem:[%s70]]
  %s72 = scalar_lea.smem %s0, 36
  %s73 = sld [smem:[%s72]]
  %s74 = scalar_lea.smem %s0, 37
  %s75 = sld [smem:[%s74]]
  %s76 = scalar_lea.smem %s0, 38
  %s77 = sld [smem:[%s76]]
  %s78 = scalar_lea.smem %s0, 39
  %s79 = sld [smem:[%s78]]
  %s80 = scalar_lea.smem %s0, 40
  %s81 = sld [smem:[%s80]]
  %s82 = scalar_lea.smem %s0, 41
  %s83 = sld [smem:[%s82]]
  %84 = xla_tuple %s79, %s81, %s83
  %s85 = sld [smem:[#allocation0]]
  $region210: #{vq_forward.1} parent=0
    _
  %s87 = ssub.s32 1, %s85
  %s88 = scalar_select 0, %s87, %s85
  %89 = sst [smem:[#allocation2]] %s7
  $region1: #{vq_forward.1} parent=0
    #allocation3 [shape = 'u8[512]{0}', space=vmem, size = 0x400, scoped, tag = 'input window, operand 11, single buffered']
    #allocation4 [shape = 's32[1]{0}', space=sflag, size = 0x4, scoped, tag = 'scoped memory for vq_forward.1']
    #allocation5 [shape = 's32[1]{0}', space=sflag, size = 0x4, scoped, tag = 'scoped memory for vq_forward.1']
    #allocation6 [shape = 'u8[512]{0}', space=vmem, size = 0x400, scoped, tag = 'input window, operand 13, single buffered']
    #allocation7 [shape = 's32[1]{0}', space=sflag, size = 0x4, scoped, tag = 'scoped memory for vq_forward.1']
    #allocation8 [shape = 'u8[512]{0}', space=vmem, size = 0x400, scoped, tag = 'input window, operand 21, single buffered']
    #allocation9 [shape = 'u8[512]{0}', space=vmem, size = 0x400, scoped, tag = 'input window, operand 23, single buffered']
    #allocation10 [shape = 's32[1]{0}', space=sflag, size = 0x4, scoped, tag = 'scoped memory for vq_forward.1']
    #allocation11 [shape = 'u8[512]{0}', space=vmem, size = 0x400, scoped, tag = 'input window, operand 25, single buffered']
    #allocation12 [shape = 'u8[512]{0}', space=vmem, size = 0x400, scoped, tag = 'input window, operand 27, single buffered']
    #allocation13 [shape = 's32[1]{0}', space=sflag, size = 0x4, scoped, tag = 'scoped memory for vq_forward.1']
    #allocation14 [shape = 'u8[512]{0}', space=vmem, size = 0x400, scoped, tag = 'input window, operand 29, single buffered']
    #allocation15 [shape = 'u8[8192]{0}', space=vmem, size = 0x2000, scoped, tag = 'output window, operand 0, single buffered']
    #allocation16 [shape = 'u8[512]{0}', space=vmem, size = 0x400, scoped, tag = 'output window, operand 1, single buffered']
    #allocation17 [shape = 's32[1]{0}', space=sflag, size = 0x4, scoped, tag = 'scoped memory for vq_forward.1']
    #allocation18 [shape = 'u8[512]{0}', space=vmem, size = 0x400, scoped, tag = 'output window, operand 2, single buffered']
    %90 = vsyncpa [#allocation4], 0
    %91 = vsyncpa [#allocation7], 0
    %92 = vsyncpa [#allocation10], 0
    %93 = vsyncpa [#allocation13], 0
    %94 = vsyncpa [#allocation5], 0
    %95 = vsyncpa [#allocation17], 0
    // Predicated region
    $region2: #{vq_forward.1} parent=1 // pred_check
      _
    $region3: #{vq_forward.1} parent=1 // pred_check_branch
      %97 = sbr.rel (0) target = $region5
    $region4: #{vq_forward.1} parent=1 // pred_region
      _
    $region5: #{vq_forward.1} parent=1 // pred_fallthru
      _
    // Predicated region
    $region6: #{vq_forward.1} parent=1 // pred_check
      _
    $region7: #{vq_forward.1} parent=1 // pred_check_branch
      %99 = sbr.rel (0) target = $region9
    $region8: #{vq_forward.1} parent=1 // pred_region
      _
    $region9: #{vq_forward.1} parent=1 // pred_fallthru
      _
    // Predicated region
    $region10: #{vq_forward.1} parent=1 // pred_check
      _
    $region11: #{vq_forward.1} parent=1 // pred_check_branch
      %101 = sbr.rel (0) target = $region13
    $region12: #{vq_forward.1} parent=1 // pred_region
      _
    $region13: #{vq_forward.1} parent=1 // pred_fallthru
      _
    // Predicated region
    $region14: #{vq_forward.1} parent=1 // pred_check
      _
    $region15: #{vq_forward.1} parent=1 // pred_check_branch
      %103 = sbr.rel (0) target = $region17
    $region16: #{vq_forward.1} parent=1 // pred_region
      _
    $region17: #{vq_forward.1} parent=1 // pred_fallthru
      _
    // Predicated region
    $region18: #{vq_forward.1} parent=1 // pred_check
      _
    $region19: #{vq_forward.1} parent=1 // pred_check_branch
      %105 = sbr.rel (0) target = $region21
    $region20: #{vq_forward.1} parent=1 // pred_region
      _
    $region21: #{vq_forward.1} parent=1 // pred_fallthru
      _
    // Predicated region
    $region22: #{vq_forward.1} parent=1 // pred_check
      _
    $region23: #{vq_forward.1} parent=1 // pred_check_branch
      %107 = sbr.rel (0) target = $region25
    $region24: #{vq_forward.1} parent=1 // pred_region
      _
    $region25: #{vq_forward.1} parent=1 // pred_fallthru
      _
    // Predicated region
    $region26: #{vq_forward.1} parent=1 // pred_check
      _
    $region27: #{vq_forward.1} parent=1 // pred_check_branch
      %109 = sbr.rel (0) target = $region29
    $region28: #{vq_forward.1} parent=1 // pred_region
      _
    $region29: #{vq_forward.1} parent=1 // pred_fallthru
      _
    // Predicated region
    $region30: #{vq_forward.1} parent=1 // pred_check
      _
    $region31: #{vq_forward.1} parent=1 // pred_check_branch
      %111 = sbr.rel (0) target = $region33
    $region32: #{vq_forward.1} parent=1 // pred_region
      _
    $region33: #{vq_forward.1} parent=1 // pred_fallthru
      _
    // Predicated region
    $region34: #{vq_forward.1} parent=1 // pred_check
      _
    $region35: #{vq_forward.1} parent=1 // pred_check_branch
      %113 = sbr.rel (0) target = $region37
    $region36: #{vq_forward.1} parent=1 // pred_region
      _
    $region37: #{vq_forward.1} parent=1 // pred_fallthru
      _
    // Predicated region
    $region38: #{vq_forward.1} parent=1 // pred_check
      _
    $region39: #{vq_forward.1} parent=1 // pred_check_branch
      %115 = sbr.rel (0) target = $region41
    $region40: #{vq_forward.1} parent=1 // pred_region
      _
    $region41: #{vq_forward.1} parent=1 // pred_fallthru
      _
    // Predicated region
    $region42: #{vq_forward.1} parent=1 // pred_check
      _
    $region43: #{vq_forward.1} parent=1 // pred_check_branch
      %117 = sbr.rel (0) target = $region45
    $region44: #{vq_forward.1} parent=1 // pred_region
      _
    $region45: #{vq_forward.1} parent=1 // pred_fallthru
      _
    // Predicated region
    $region46: #{vq_forward.1} parent=1 // pred_check
      _
    $region47: #{vq_forward.1} parent=1 // pred_check_branch
      %119 = sbr.rel (0) target = $region49
    $region48: #{vq_forward.1} parent=1 // pred_region
      %s121 = ssub.s32 16, 16
      %122 = vsyncadd [#allocation4], %s121
      %s124 = sshll.u32 [#allocation3], 4
      %s125 = int_to_ptr.vmem [resolvable:$true] %s124
      %127 = dma.hbm_to_vmem [thread:$0]  %s23, 16, %s125, [#allocation4]
    $region49: #{vq_forward.1} parent=1 // pred_fallthru
      _
    // Predicated region
    $region50: #{vq_forward.1} parent=1 // pred_check
      _
    $region51: #{vq_forward.1} parent=1 // pred_check_branch
      %129 = sbr.rel (0) target = $region53
    $region52: #{vq_forward.1} parent=1 // pred_region
      _
    $region53: #{vq_forward.1} parent=1 // pred_fallthru
      _
    // Predicated region
    $region54: #{vq_forward.1} parent=1 // pred_check
      _
    $region55: #{vq_forward.1} parent=1 // pred_check_branch
      %131 = sbr.rel (0) target = $region57
    $region56: #{vq_forward.1} parent=1 // pred_region
      %s133 = ssub.s32 16, 16
      %134 = vsyncadd [#allocation7], %s133
      %s136 = sshll.u32 [#allocation6], 4
      %s137 = int_to_ptr.vmem [resolvable:$true] %s136
      %139 = dma.hbm_to_vmem [thread:$0]  %s27, 16, %s137, [#allocation7]
    $region57: #{vq_forward.1} parent=1 // pred_fallthru
      _
    // Predicated region
    $region58: #{vq_forward.1} parent=1 // pred_check
      _
    $region59: #{vq_forward.1} parent=1 // pred_check_branch
      %141 = sbr.rel (0) target = $region61
    $region60: #{vq_forward.1} parent=1 // pred_region
      _
    $region61: #{vq_forward.1} parent=1 // pred_fallthru
      _
    // Predicated region
    $region62: #{vq_forward.1} parent=1 // pred_check
      _
    $region63: #{vq_forward.1} parent=1 // pred_check_branch
      %143 = sbr.rel (0) target = $region65
    $region64: #{vq_forward.1} parent=1 // pred_region
      _
    $region65: #{vq_forward.1} parent=1 // pred_fallthru
      _
    // Predicated region
    $region66: #{vq_forward.1} parent=1 // pred_check
      _
    $region67: #{vq_forward.1} parent=1 // pred_check_branch
      %145 = sbr.rel (0) target = $region69
    $region68: #{vq_forward.1} parent=1 // pred_region
      _
    $region69: #{vq_forward.1} parent=1 // pred_fallthru
      _
    // Predicated region
    $region70: #{vq_forward.1} parent=1 // pred_check
      _
    $region71: #{vq_forward.1} parent=1 // pred_check_branch
      %147 = sbr.rel (0) target = $region73
    $region72: #{vq_forward.1} parent=1 // pred_region
      _
    $region73: #{vq_forward.1} parent=1 // pred_fallthru
      _
    // Predicated region
    $region74: #{vq_forward.1} parent=1 // pred_check
      _
    $region75: #{vq_forward.1} parent=1 // pred_check_branch
      %149 = sbr.rel (0) target = $region77
    $region76: #{vq_forward.1} parent=1 // pred_region
      _
    $region77: #{vq_forward.1} parent=1 // pred_fallthru
      _
    // Predicated region
    $region78: #{vq_forward.1} parent=1 // pred_check
      _
    $region79: #{vq_forward.1} parent=1 // pred_check_branch
      %151 = sbr.rel (0) target = $region81
    $region80: #{vq_forward.1} parent=1 // pred_region
      _
    $region81: #{vq_forward.1} parent=1 // pred_fallthru
      _
    // Predicated region
    $region82: #{vq_forward.1} parent=1 // pred_check
      _
    $region83: #{vq_forward.1} parent=1 // pred_check_branch
      %153 = sbr.rel (0) target = $region85
    $region84: #{vq_forward.1} parent=1 // pred_region
      _
    $region85: #{vq_forward.1} parent=1 // pred_fallthru
      _
    // Predicated region
    $region86: #{vq_forward.1} parent=1 // pred_check
      _
    $region87: #{vq_forward.1} parent=1 // pred_check_branch
      %155 = sbr.rel (0) target = $region89
    $region88: #{vq_forward.1} parent=1 // pred_region
      %s157 = ssub.s32 16, 16
      %158 = vsyncadd [#allocation7], %s157
      %s160 = sshll.u32 [#allocation8], 4
      %s161 = int_to_ptr.vmem [resolvable:$true] %s160
      %163 = dma.hbm_to_vmem [thread:$0]  %s43, 16, %s161, [#allocation7]
    $region89: #{vq_forward.1} parent=1 // pred_fallthru
      _
    // Predicated region
    $region90: #{vq_forward.1} parent=1 // pred_check
      _
    $region91: #{vq_forward.1} parent=1 // pred_check_branch
      %165 = sbr.rel (0) target = $region93
    $region92: #{vq_forward.1} parent=1 // pred_region
      _
    $region93: #{vq_forward.1} parent=1 // pred_fallthru
      _
    // Predicated region
    $region94: #{vq_forward.1} parent=1 // pred_check
      _
    $region95: #{vq_forward.1} parent=1 // pred_check_branch
      %167 = sbr.rel (0) target = $region97
    $region96: #{vq_forward.1} parent=1 // pred_region
      %s169 = ssub.s32 16, 16
      %170 = vsyncadd [#allocation10], %s169
      %s172 = sshll.u32 [#allocation9], 4
      %s173 = int_to_ptr.vmem [resolvable:$true] %s172
      %175 = dma.hbm_to_vmem [thread:$0]  %s47, 16, %s173, [#allocation10]
    $region97: #{vq_forward.1} parent=1 // pred_fallthru
      _
    // Predicated region
    $region98: #{vq_forward.1} parent=1 // pred_check
      _
    $region99: #{vq_forward.1} parent=1 // pred_check_branch
      %177 = sbr.rel (0) target = $region101
    $region100: #{vq_forward.1} parent=1 // pred_region
      _
    $region101: #{vq_forward.1} parent=1 // pred_fallthru
      _
    // Predicated region
    $region102: #{vq_forward.1} parent=1 // pred_check
      _
    $region103: #{vq_forward.1} parent=1 // pred_check_branch
      %179 = sbr.rel (0) target = $region105
    $region104: #{vq_forward.1} parent=1 // pred_region
      %s181 = ssub.s32 16, 16
      %182 = vsyncadd [#allocation10], %s181
      %s184 = sshll.u32 [#allocation11], 4
      %s185 = int_to_ptr.vmem [resolvable:$true] %s184
      %187 = dma.hbm_to_vmem [thread:$0]  %s51, 16, %s185, [#allocation10]
    $region105: #{vq_forward.1} parent=1 // pred_fallthru
      _
    // Predicated region
    $region106: #{vq_forward.1} parent=1 // pred_check
      _
    $region107: #{vq_forward.1} parent=1 // pred_check_branch
      %189 = sbr.rel (0) target = $region109
    $region108: #{vq_forward.1} parent=1 // pred_region
      _
    $region109: #{vq_forward.1} parent=1 // pred_fallthru
      _
    // Predicated region
    $region110: #{vq_forward.1} parent=1 // pred_check
      _
    $region111: #{vq_forward.1} parent=1 // pred_check_branch
      %191 = sbr.rel (0) target = $region113
    $region112: #{vq_forward.1} parent=1 // pred_region
      %s193 = ssub.s32 16, 16
      %194 = vsyncadd [#allocation13], %s193
      %s196 = sshll.u32 [#allocation12], 4
      %s197 = int_to_ptr.vmem [resolvable:$true] %s196
      %199 = dma.hbm_to_vmem [thread:$0]  %s55, 16, %s197, [#allocation13]
    $region113: #{vq_forward.1} parent=1 // pred_fallthru
      _
    // Predicated region
    $region114: #{vq_forward.1} parent=1 // pred_check
      _
    $region115: #{vq_forward.1} parent=1 // pred_check_branch
      %201 = sbr.rel (0) target = $region117
    $region116: #{vq_forward.1} parent=1 // pred_region
      _
    $region117: #{vq_forward.1} parent=1 // pred_fallthru
      _
    // Predicated region
    $region118: #{vq_forward.1} parent=1 // pred_check
      _
    $region119: #{vq_forward.1} parent=1 // pred_check_branch
      %203 = sbr.rel (0) target = $region121
    $region120: #{vq_forward.1} parent=1 // pred_region
      %s205 = ssub.s32 16, 16
      %206 = vsyncadd [#allocation13], %s205
      %s208 = sshll.u32 [#allocation14], 4
      %s209 = int_to_ptr.vmem [resolvable:$true] %s208
      %211 = dma.hbm_to_vmem [thread:$0]  %s59, 16, %s209, [#allocation13]
    $region121: #{vq_forward.1} parent=1 // pred_fallthru
      _
    // Predicated region
    $region122: #{vq_forward.1} parent=1 // pred_check
      _
    $region123: #{vq_forward.1} parent=1 // pred_check_branch
      %213 = sbr.rel (0) target = $region125
    $region124: #{vq_forward.1} parent=1 // pred_region
      _
    $region125: #{vq_forward.1} parent=1 // pred_fallthru
      _
    // Predicated region
    $region126: #{vq_forward.1} parent=1 // pred_check
      _
    $region127: #{vq_forward.1} parent=1 // pred_check_branch
      %215 = sbr.rel (0) target = $region129
    $region128: #{vq_forward.1} parent=1 // pred_region
      _
    $region129: #{vq_forward.1} parent=1 // pred_fallthru
      _
    // Predicated region
    $region130: #{vq_forward.1} parent=1 // pred_check
      _
    $region131: #{vq_forward.1} parent=1 // pred_check_branch
      %217 = sbr.rel (0) target = $region133
    $region132: #{vq_forward.1} parent=1 // pred_region
      _
    $region133: #{vq_forward.1} parent=1 // pred_fallthru
      _
    // Predicated region
    $region134: #{vq_forward.1} parent=1 // pred_check
      _
    $region135: #{vq_forward.1} parent=1 // pred_check_branch
      %219 = sbr.rel (0) target = $region137
    $region136: #{vq_forward.1} parent=1 // pred_region
      _
    $region137: #{vq_forward.1} parent=1 // pred_fallthru
      _
    // Predicated region
    $region138: #{vq_forward.1} parent=1 // pred_check
      _
    $region139: #{vq_forward.1} parent=1 // pred_check_branch
      %221 = sbr.rel (0) target = $region141
    $region140: #{vq_forward.1} parent=1 // pred_region
      _
    $region141: #{vq_forward.1} parent=1 // pred_fallthru
      _
    // Predicated region
    $region142: #{vq_forward.1} parent=1 // pred_check
      _
    $region143: #{vq_forward.1} parent=1 // pred_check_branch
      %223 = sbr.rel (0) target = $region145
    $region144: #{vq_forward.1} parent=1 // pred_region
      _
    $region145: #{vq_forward.1} parent=1 // pred_fallthru
      _
    // Predicated region
    $region146: #{vq_forward.1} parent=1 // pred_check
      _
    $region147: #{vq_forward.1} parent=1 // pred_check_branch
      %225 = sbr.rel (0) target = $region149
    $region148: #{vq_forward.1} parent=1 // pred_region
      _
    $region149: #{vq_forward.1} parent=1 // pred_fallthru
      _
    // Predicated region
    $region150: #{vq_forward.1} parent=1 // pred_check
      _
    $region151: #{vq_forward.1} parent=1 // pred_check_branch
      %227 = sbr.rel (0) target = $region153
    $region152: #{vq_forward.1} parent=1 // pred_region
      _
    $region153: #{vq_forward.1} parent=1 // pred_fallthru
      _
    // Predicated region
    $region154: #{vq_forward.1} parent=1 // pred_check
      _
    $region155: #{vq_forward.1} parent=1 // pred_check_branch
      %229 = sbr.rel (0) target = $region157
    $region156: #{vq_forward.1} parent=1 // pred_region
      _
    $region157: #{vq_forward.1} parent=1 // pred_fallthru
      _
    // Predicated region
    $region158: #{vq_forward.1} parent=1 // pred_check
      _
    $region159: #{vq_forward.1} parent=1 // pred_check_branch
      %231 = sbr.rel (0) target = $region161
    $region160: #{vq_forward.1} parent=1 // pred_region
      %232 = dma.done [#allocation4], 16
    $region161: #{vq_forward.1} parent=1 // pred_fallthru
      _
    // Predicated region
    $region162: #{vq_forward.1} parent=1 // pred_check
      _
    $region163: #{vq_forward.1} parent=1 // pred_check_branch
      %234 = sbr.rel (0) target = $region165
    $region164: #{vq_forward.1} parent=1 // pred_region
      %235 = dma.done [#allocation7], 16
    $region165: #{vq_forward.1} parent=1 // pred_fallthru
      _
    // Predicated region
    $region166: #{vq_forward.1} parent=1 // pred_check
      _
    $region167: #{vq_forward.1} parent=1 // pred_check_branch
      %237 = sbr.rel (0) target = $region169
    $region168: #{vq_forward.1} parent=1 // pred_region
      %238 = dma.done [#allocation7], 16
    $region169: #{vq_forward.1} parent=1 // pred_fallthru
      _
    // Predicated region
    $region170: #{vq_forward.1} parent=1 // pred_check
      _
    $region171: #{vq_forward.1} parent=1 // pred_check_branch
      %240 = sbr.rel (0) target = $region173
    $region172: #{vq_forward.1} parent=1 // pred_region
      %241 = dma.done [#allocation10], 16
    $region173: #{vq_forward.1} parent=1 // pred_fallthru
      _
    // Predicated region
    $region174: #{vq_forward.1} parent=1 // pred_check
      _
    $region175: #{vq_forward.1} parent=1 // pred_check_branch
      %243 = sbr.rel (0) target = $region177
    $region176: #{vq_forward.1} parent=1 // pred_region
      %244 = dma.done [#allocation10], 16
    $region177: #{vq_forward.1} parent=1 // pred_fallthru
      _
    // Predicated region
    $region178: #{vq_forward.1} parent=1 // pred_check
      _
    $region179: #{vq_forward.1} parent=1 // pred_check_branch
      %246 = sbr.rel (0) target = $region181
    $region180: #{vq_forward.1} parent=1 // pred_region
      %247 = dma.done [#allocation13], 16
    $region181: #{vq_forward.1} parent=1 // pred_fallthru
      _
    // Predicated region
    $region182: #{vq_forward.1} parent=1 // pred_check
      _
    $region183: #{vq_forward.1} parent=1 // pred_check_branch
      %249 = sbr.rel (0) target = $region185
    $region184: #{vq_forward.1} parent=1 // pred_region
      %250 = dma.done [#allocation13], 16
    $region185: #{vq_forward.1} parent=1 // pred_fallthru
      _
    %v251 = vld [vmem:[%s1] sm:$0xff]
    %v252 = vld [vmem:[%s1 + $0x8] sm:$0xff]
    %v253 = vld [vmem:[%s9] sm:$0xff]
    %v254 = vld [vmem:[%s9 + $0x8] sm:$0xff]
    %v255 = vld [vmem:[%s11] sm:$0x1]
    %v257 = vlaneseq
    %v258 = vshrl.u32 %v257, 7
    %v259 = vsub.s32 0, %v258
    %v260 = vrot.slane %v255, %v259
    %vm262 = vcmask 130048
    %v264 = vsel %vm262, %v251, 0
    %v267 = vsel %vm262, %v252, 0
    %269 = vmatprep.subr.mxu0 0.0
    %270 = vmatpush1.msra.mxu0 %v253
    %271 = vmatprep.subr.mxu0 0.0
    %272 = vmatpush1.msra.mxu0 %v254
    %273 = vmatprep.subr.mxu0 0.0
    %274 = vmatpush1.msra.mxu0 0.0
    %275 = vmatprep.subr.mxu0 0.0
    %276 = vmatpush1.msra.mxu0 0.0
    %277 = vmatprep.subr.mxu0 0.0
    %278 = vmatpush1.msra.mxu0 0.0
    %279 = vmatprep.subr.mxu0 0.0
    %280 = vmatpush1.msra.mxu0 0.0
    %281 = vmatprep.subr.mxu0 0.0
    %282 = vmatpush1.msra.mxu0 0.0
    %283 = vmatprep.subr.mxu0 0.0
    %284 = vmatpush1.msra.mxu0 0.0
    %285 = vmatprep.subr.mxu0 0.0
    %286 = vmatpush1.msra.mxu0 0.0
    %287 = vmatprep.subr.mxu0 0.0
    %288 = vmatpush1.msra.mxu0 0.0
    %289 = vmatprep.subr.mxu0 0.0
    %290 = vmatpush1.msra.mxu0 0.0
    %291 = vmatprep.subr.mxu0 0.0
    %292 = vmatpush1.msra.mxu0 0.0
    %293 = vmatprep.subr.mxu0 0.0
    %294 = vmatpush1.msra.mxu0 0.0
    %295 = vmatprep.subr.mxu0 0.0
    %296 = vmatpush1.msra.mxu0 0.0
    %297 = vmatprep.subr.mxu0 0.0
    %298 = vmatpush1.msra.mxu0 0.0
    %299 = vmatprep.subr.mxu0 0.0
    %300 = vmatpush1.msra.mxu0 0.0
    %301 = vmatprep.subr.mxu0 0.0
    %302 = vmatpush1.msra.mxu0 0.0
    %303 = vmatprep.subr.mxu0 0.0
    %304 = vmatpush1.msra.mxu0 0.0
    %305 = vmatprep.subr.mxu0 0.0
    %306 = vmatpush1.msra.mxu0 0.0
    %307 = vmatprep.subr.mxu0 0.0
    %308 = vmatpush1.msra.mxu0 0.0
    %309 = vmatprep.subr.mxu0 0.0
    %310 = vmatpush1.msra.mxu0 0.0
    %311 = vmatprep.subr.mxu0 0.0
    %312 = vmatpush1.msra.mxu0 0.0
    %313 = vmatprep.subr.mxu0 0.0
    %314 = vmatpush1.msra.mxu0 0.0
    %315 = vmatprep.subr.mxu0 0.0
    %316 = vmatpush1.msra.mxu0 0.0
    %317 = vmatprep.subr.mxu0 0.0
    %318 = vmatpush1.msra.mxu0 0.0
    %319 = vmatprep.subr.mxu0 0.0
    %320 = vmatpush1.msra.mxu0 0.0
    %321 = vmatprep.subr.mxu0 0.0
    %322 = vmatpush1.msra.mxu0 0.0
    %323 = vmatprep.subr.mxu0 0.0
    %324 = vmatpush1.msra.mxu0 0.0
    %325 = vmatprep.subr.mxu0 0.0
    %326 = vmatpush1.msra.mxu0 0.0
    %327 = vmatprep.subr.mxu0 0.0
    %328 = vmatpush1.msra.mxu0 0.0
    %329 = vmatprep.subr.mxu0 0.0
    %330 = vmatpush1.msra.mxu0 0.0
    %331 = vmatprep.subr.mxu0 0.0
    %332 = vmatpush1.msra.mxu0 0.0
    %333 = vmatprep.mubr.f32.mxu0 0.0
    %334 = vmatmul.mubr.f32.gmra.mrb[0].mxu0 %v264
    %v335 = vpop.f32.mrb[0].mxu0
    %v336 = vadd.f32 %v260, %v335
    %v337 = vpop.f32.mrb[0].mxu0
    %338 = vmatprep.mubr.f32.mxu0 0.0
    %339 = vmatmul.mubr.f32.gmra.mrb[0].mxu0 %v267
    %v340 = vpop.f32.mrb[0].mxu0
    %v341 = vadd.f32 %v260, %v340
    %v342 = vpop.f32.mrb[0].mxu0
    %343 = vdwg.mxu0
    %vm344 = vcmask 261120
    %345 = vst.msk [vmem:[#allocation15] sm:$0xff] %vm344, %v336
    %346 = vst.msk [vmem:[#allocation15 + $0x8] sm:$0xff] %vm344, %v341
    %v347 = vld [vmem:[%s13] sm:$0xff]
    %v348 = vld [vmem:[%s13 + $0x8] sm:$0xff]
    %v349 = vld [vmem:[%s13 + $0x10] sm:$0xff]
    %v350 = vld [vmem:[%s13 + $0x18] sm:$0xff]
    %v351 = vld [vmem:[%s15] sm:$0x1]
    %v353 = vlaneseq
    %v354 = vshrl.u32 %v353, 7
    %v355 = vsub.s32 0, %v354
    %v356 = vrot.slane %v351, %v355
    %v359 = vsel %vm344, %v336, 0
    %v362 = vsel %vm344, %v341, 0
    %364 = vmatprep.subr.mxu0 0.0
    %365 = vmatpush1.msra.mxu0 %v347
    %366 = vmatprep.subr.mxu0 0.0
    %367 = vmatpush1.msra.mxu0 %v348
    %368 = vmatprep.subr.mxu0 0.0
    %369 = vmatpush1.msra.mxu0 %v349
    %370 = vmatprep.subr.mxu0 0.0
    %371 = vmatpush1.msra.mxu0 %v350
    %372 = vmatprep.subr.mxu0 0.0
    %373 = vmatpush1.msra.mxu0 0.0
    %374 = vmatprep.subr.mxu0 0.0
    %375 = vmatpush1.msra.mxu0 0.0
    %376 = vmatprep.subr.mxu0 0.0
    %377 = vmatpush1.msra.mxu0 0.0
    %378 = vmatprep.subr.mxu0 0.0
    %379 = vmatpush1.msra.mxu0 0.0
    %380 = vmatprep.subr.mxu0 0.0
    %381 = vmatpush1.msra.mxu0 0.0
    %382 = vmatprep.subr.mxu0 0.0
    %383 = vmatpush1.msra.mxu0 0.0
    %384 = vmatprep.subr.mxu0 0.0
    %385 = vmatpush1.msra.mxu0 0.0
    %386 = vmatprep.subr.mxu0 0.0
    %387 = vmatpush1.msra.mxu0 0.0
    %388 = vmatprep.subr.mxu0 0.0
    %389 = vmatpush1.msra.mxu0 0.0
    %390 = vmatprep.subr.mxu0 0.0
    %391 = vmatpush1.msra.mxu0 0.0
    %392 = vmatprep.subr.mxu0 0.0
    %393 = vmatpush1.msra.mxu0 0.0
    %394 = vmatprep.subr.mxu0 0.0
    %395 = vmatpush1.msra.mxu0 0.0
    %396 = vmatprep.subr.mxu0 0.0
    %397 = vmatpush1.msra.mxu0 0.0
    %398 = vmatprep.subr.mxu0 0.0
    %399 = vmatpush1.msra.mxu0 0.0
    %400 = vmatprep.subr.mxu0 0.0
    %401 = vmatpush1.msra.mxu0 0.0
    %402 = vmatprep.subr.mxu0 0.0
    %403 = vmatpush1.msra.mxu0 0.0
    %404 = vmatprep.subr.mxu0 0.0
    %405 = vmatpush1.msra.mxu0 0.0
    %406 = vmatprep.subr.mxu0 0.0
    %407 = vmatpush1.msra.mxu0 0.0
    %408 = vmatprep.subr.mxu0 0.0
    %409 = vmatpush1.msra.mxu0 0.0
    %410 = vmatprep.subr.mxu0 0.0
    %411 = vmatpush1.msra.mxu0 0.0
    %412 = vmatprep.subr.mxu0 0.0
    %413 = vmatpush1.msra.mxu0 0.0
    %414 = vmatprep.subr.mxu0 0.0
    %415 = vmatpush1.msra.mxu0 0.0
    %416 = vmatprep.subr.mxu0 0.0
    %417 = vmatpush1.msra.mxu0 0.0
    %418 = vmatprep.subr.mxu0 0.0
    %419 = vmatpush1.msra.mxu0 0.0
    %420 = vmatprep.subr.mxu0 0.0
    %421 = vmatpush1.msra.mxu0 0.0
    %422 = vmatprep.subr.mxu0 0.0
    %423 = vmatpush1.msra.mxu0 0.0
    %424 = vmatprep.subr.mxu0 0.0
    %425 = vmatpush1.msra.mxu0 0.0
    %426 = vmatprep.subr.mxu0 0.0
    %427 = vmatpush1.msra.mxu0 0.0
    %428 = vmatprep.mubr.f32.mxu0 0.0
    %429 = vmatmul.mubr.f32.gmra.mrb[0].mxu0 %v359
    %v430 = vpop.f32.mrb[0].mxu0
    %v431 = vadd.f32 %v356, %v430
    %v432 = vpop.f32.mrb[0].mxu0
    %433 = vmatprep.mubr.f32.mxu0 0.0
    %434 = vmatmul.mubr.f32.gmra.mrb[0].mxu0 %v362
    %v435 = vpop.f32.mrb[0].mxu0
    %v436 = vadd.f32 %v356, %v435
    %v437 = vpop.f32.mrb[0].mxu0
    %438 = vdwg.mxu0
    %v439 = vtanh.pop %v431
    %v440 = vtanh.pop %v436
    %v441 = vld [vmem:[%s17] sm:$0xff]
    %v442 = vld [vmem:[%s17 + $0x8] sm:$0xff]
    %v443 = vld [vmem:[%s17 + $0x10] sm:$0xff]
    %v444 = vld [vmem:[%s17 + $0x18] sm:$0xff]
    %v445 = vld [vmem:[%s19] sm:$0x1]
    %v447 = vlaneseq
    %v448 = vshrl.u32 %v447, 7
    %v449 = vsub.s32 0, %v448
    %v450 = vrot.slane %v445, %v449
    %v453 = vsel %vm344, %v439, 0
    %v456 = vsel %vm344, %v440, 0
    %458 = vmatprep.subr.mxu0 0.0
    %459 = vmatpush1.msra.mxu0 %v441
    %460 = vmatprep.subr.mxu0 0.0
    %461 = vmatpush1.msra.mxu0 %v442
    %462 = vmatprep.subr.mxu0 0.0
    %463 = vmatpush1.msra.mxu0 %v443
    %464 = vmatprep.subr.mxu0 0.0
    %465 = vmatpush1.msra.mxu0 %v444
    %466 = vmatprep.subr.mxu0 0.0
    %467 = vmatpush1.msra.mxu0 0.0
    %468 = vmatprep.subr.mxu0 0.0
    %469 = vmatpush1.msra.mxu0 0.0
    %470 = vmatprep.subr.mxu0 0.0
    %471 = vmatpush1.msra.mxu0 0.0
    %472 = vmatprep.subr.mxu0 0.0
    %473 = vmatpush1.msra.mxu0 0.0
    %474 = vmatprep.subr.mxu0 0.0
    %475 = vmatpush1.msra.mxu0 0.0
    %476 = vmatprep.subr.mxu0 0.0
    %477 = vmatpush1.msra.mxu0 0.0
    %478 = vmatprep.subr.mxu0 0.0
    %479 = vmatpush1.msra.mxu0 0.0
    %480 = vmatprep.subr.mxu0 0.0
    %481 = vmatpush1.msra.mxu0 0.0
    %482 = vmatprep.subr.mxu0 0.0
    %483 = vmatpush1.msra.mxu0 0.0
    %484 = vmatprep.subr.mxu0 0.0
    %485 = vmatpush1.msra.mxu0 0.0
    %486 = vmatprep.subr.mxu0 0.0
    %487 = vmatpush1.msra.mxu0 0.0
    %488 = vmatprep.subr.mxu0 0.0
    %489 = vmatpush1.msra.mxu0 0.0
    %490 = vmatprep.subr.mxu0 0.0
    %491 = vmatpush1.msra.mxu0 0.0
    %492 = vmatprep.subr.mxu0 0.0
    %493 = vmatpush1.msra.mxu0 0.0
    %494 = vmatprep.subr.mxu0 0.0
    %495 = vmatpush1.msra.mxu0 0.0
    %496 = vmatprep.subr.mxu0 0.0
    %497 = vmatpush1.msra.mxu0 0.0
    %498 = vmatprep.subr.mxu0 0.0
    %499 = vmatpush1.msra.mxu0 0.0
    %500 = vmatprep.subr.mxu0 0.0
    %501 = vmatpush1.msra.mxu0 0.0
    %502 = vmatprep.subr.mxu0 0.0
    %503 = vmatpush1.msra.mxu0 0.0
    %504 = vmatprep.subr.mxu0 0.0
    %505 = vmatpush1.msra.mxu0 0.0
    %506 = vmatprep.subr.mxu0 0.0
    %507 = vmatpush1.msra.mxu0 0.0
    %508 = vmatprep.subr.mxu0 0.0
    %509 = vmatpush1.msra.mxu0 0.0
    %510 = vmatprep.subr.mxu0 0.0
    %511 = vmatpush1.msra.mxu0 0.0
    %512 = vmatprep.subr.mxu0 0.0
    %513 = vmatpush1.msra.mxu0 0.0
    %514 = vmatprep.subr.mxu0 0.0
    %515 = vmatpush1.msra.mxu0 0.0
    %516 = vmatprep.subr.mxu0 0.0
    %517 = vmatpush1.msra.mxu0 0.0
    %518 = vmatprep.subr.mxu0 0.0
    %519 = vmatpush1.msra.mxu0 0.0
    %520 = vmatprep.subr.mxu0 0.0
    %521 = vmatpush1.msra.mxu0 0.0
    %522 = vmatprep.mubr.f32.mxu0 0.0
    %523 = vmatmul.mubr.f32.gmra.mrb[0].mxu0 %v453
    %v524 = vpop.f32.mrb[0].mxu0
    %v525 = vadd.f32 %v450, %v524
    %v526 = vpop.f32.mrb[0].mxu0
    %527 = vmatprep.mubr.f32.mxu0 0.0
    %528 = vmatmul.mubr.f32.gmra.mrb[0].mxu0 %v456
    %v529 = vpop.f32.mrb[0].mxu0
    %v530 = vadd.f32 %v450, %v529
    %v531 = vpop.f32.mrb[0].mxu0
    %532 = vdwg.mxu0
    %v533 = vld [vmem:[%s21] sm:$0xff]
    %v534 = vld [vmem:[%s21 + $0x8] sm:$0xff]
    %v535 = vld [vmem:[#allocation3] sm:$0x1]
    %v537 = vlaneseq
    %v538 = vshrl.u32 %v537, 7
    %v539 = vsub.s32 0, %v538
    %v540 = vrot.slane %v535, %v539
    %v543 = vsel %vm262, %v525, 0
    %v546 = vsel %vm262, %v530, 0
    %548 = vmatprep.subr.mxu0 0.0
    %549 = vmatpush1.msra.mxu0 %v533
    %550 = vmatprep.subr.mxu0 0.0
    %551 = vmatpush1.msra.mxu0 %v534
    %552 = vmatprep.subr.mxu0 0.0
    %553 = vmatpush1.msra.mxu0 0.0
    %554 = vmatprep.subr.mxu0 0.0
    %555 = vmatpush1.msra.mxu0 0.0
    %556 = vmatprep.subr.mxu0 0.0
    %557 = vmatpush1.msra.mxu0 0.0
    %558 = vmatprep.subr.mxu0 0.0
    %559 = vmatpush1.msra.mxu0 0.0
    %560 = vmatprep.subr.mxu0 0.0
    %561 = vmatpush1.msra.mxu0 0.0
    %562 = vmatprep.subr.mxu0 0.0
    %563 = vmatpush1.msra.mxu0 0.0
    %564 = vmatprep.subr.mxu0 0.0
    %565 = vmatpush1.msra.mxu0 0.0
    %566 = vmatprep.subr.mxu0 0.0
    %567 = vmatpush1.msra.mxu0 0.0
    %568 = vmatprep.subr.mxu0 0.0
    %569 = vmatpush1.msra.mxu0 0.0
    %570 = vmatprep.subr.mxu0 0.0
    %571 = vmatpush1.msra.mxu0 0.0
    %572 = vmatprep.subr.mxu0 0.0
    %573 = vmatpush1.msra.mxu0 0.0
    %574 = vmatprep.subr.mxu0 0.0
    %575 = vmatpush1.msra.mxu0 0.0
    %576 = vmatprep.subr.mxu0 0.0
    %577 = vmatpush1.msra.mxu0 0.0
    %578 = vmatprep.subr.mxu0 0.0
    %579 = vmatpush1.msra.mxu0 0.0
    %580 = vmatprep.subr.mxu0 0.0
    %581 = vmatpush1.msra.mxu0 0.0
    %582 = vmatprep.subr.mxu0 0.0
    %583 = vmatpush1.msra.mxu0 0.0
    %584 = vmatprep.subr.mxu0 0.0
    %585 = vmatpush1.msra.mxu0 0.0
    %586 = vmatprep.subr.mxu0 0.0
    %587 = vmatpush1.msra.mxu0 0.0
    %588 = vmatprep.subr.mxu0 0.0
    %589 = vmatpush1.msra.mxu0 0.0
    %590 = vmatprep.subr.mxu0 0.0
    %591 = vmatpush1.msra.mxu0 0.0
    %592 = vmatprep.subr.mxu0 0.0
    %593 = vmatpush1.msra.mxu0 0.0
    %594 = vmatprep.subr.mxu0 0.0
    %595 = vmatpush1.msra.mxu0 0.0
    %596 = vmatprep.subr.mxu0 0.0
    %597 = vmatpush1.msra.mxu0 0.0
    %598 = vmatprep.subr.mxu0 0.0
    %599 = vmatpush1.msra.mxu0 0.0
    %600 = vmatprep.subr.mxu0 0.0
    %601 = vmatpush1.msra.mxu0 0.0
    %602 = vmatprep.subr.mxu0 0.0
    %603 = vmatpush1.msra.mxu0 0.0
    %604 = vmatprep.subr.mxu0 0.0
    %605 = vmatpush1.msra.mxu0 0.0
    %606 = vmatprep.subr.mxu0 0.0
    %607 = vmatpush1.msra.mxu0 0.0
    %608 = vmatprep.subr.mxu0 0.0
    %609 = vmatpush1.msra.mxu0 0.0
    %610 = vmatprep.subr.mxu0 0.0
    %611 = vmatpush1.msra.mxu0 0.0
    %612 = vmatprep.mubr.f32.mxu0 0.0
    %613 = vmatmul.mubr.f32.gmra.mrb[0].mxu0 %v543
    %v614 = vpop.f32.mrb[0].mxu0
    %v615 = vadd.f32 %v540, %v614
    %v616 = vpop.f32.mrb[0].mxu0
    %617 = vmatprep.mubr.f32.mxu0 0.0
    %618 = vmatmul.mubr.f32.gmra.mrb[0].mxu0 %v546
    %v619 = vpop.f32.mrb[0].mxu0
    %v620 = vadd.f32 %v540, %v619
    %v621 = vpop.f32.mrb[0].mxu0
    %622 = vdwg.mxu0
    %v623 = vmul.f32 %v615, %v615
    %v624 = vmul.f32 %v620, %v620
    %v625 = vmul.f32 %v615, %v623
    %v626 = vmul.f32 %v620, %v624
    %v627 = vmul.f32 %v625, 0.044715
    %v628 = vmul.f32 %v626, 0.044715
    %v629 = vadd.f32 %v615, %v627
    %v630 = vadd.f32 %v620, %v628
    %v631 = vmul.f32 %v629, 0.7978846
    %v632 = vmul.f32 %v630, 0.7978846
    %v633 = vtanh.pop %v631
    %v634 = vtanh.pop %v632
    %v635 = vadd.f32 %v633, 1.0
    %v636 = vadd.f32 %v634, 1.0
    %v637 = vmul.f32 %v635, 0.5
    %v638 = vmul.f32 %v636, 0.5
    %v639 = vmul.f32 %v615, %v637
    %v640 = vmul.f32 %v620, %v638
    %v641 = vld [vmem:[%s25] sm:$0xff]
    %v642 = vld [vmem:[%s25 + $0x8] sm:$0xff]
    %v643 = vld [vmem:[%s25 + $0x10] sm:$0xff]
    %v644 = vld [vmem:[%s25 + $0x18] sm:$0xff]
    %v645 = vld [vmem:[#allocation6] sm:$0x1]
    %v647 = vlaneseq
    %v648 = vshrl.u32 %v647, 7
    %v649 = vsub.s32 0, %v648
    %v650 = vrot.slane %v645, %v649
    %v653 = vsel %vm344, %v639, 0
    %v656 = vsel %vm344, %v640, 0
    %658 = vmatprep.subr.mxu0 0.0
    %659 = vmatpush1.msra.mxu0 %v641
    %660 = vmatprep.subr.mxu0 0.0
    %661 = vmatpush1.msra.mxu0 %v642
    %662 = vmatprep.subr.mxu0 0.0
    %663 = vmatpush1.msra.mxu0 %v643
    %664 = vmatprep.subr.mxu0 0.0
    %665 = vmatpush1.msra.mxu0 %v644
    %666 = vmatprep.subr.mxu0 0.0
    %667 = vmatpush1.msra.mxu0 0.0
    %668 = vmatprep.subr.mxu0 0.0
    %669 = vmatpush1.msra.mxu0 0.0
    %670 = vmatprep.subr.mxu0 0.0
    %671 = vmatpush1.msra.mxu0 0.0
    %672 = vmatprep.subr.mxu0 0.0
    %673 = vmatpush1.msra.mxu0 0.0
    %674 = vmatprep.subr.mxu0 0.0
    %675 = vmatpush1.msra.mxu0 0.0
    %676 = vmatprep.subr.mxu0 0.0
    %677 = vmatpush1.msra.mxu0 0.0
    %678 = vmatprep.subr.mxu0 0.0
    %679 = vmatpush1.msra.mxu0 0.0
    %680 = vmatprep.subr.mxu0 0.0
    %681 = vmatpush1.msra.mxu0 0.0
    %682 = vmatprep.subr.mxu0 0.0
    %683 = vmatpush1.msra.mxu0 0.0
    %684 = vmatprep.subr.mxu0 0.0
    %685 = vmatpush1.msra.mxu0 0.0
    %686 = vmatprep.subr.mxu0 0.0
    %687 = vmatpush1.msra.mxu0 0.0
    %688 = vmatprep.subr.mxu0 0.0
    %689 = vmatpush1.msra.mxu0 0.0
    %690 = vmatprep.subr.mxu0 0.0
    %691 = vmatpush1.msra.mxu0 0.0
    %692 = vmatprep.subr.mxu0 0.0
    %693 = vmatpush1.msra.mxu0 0.0
    %694 = vmatprep.subr.mxu0 0.0
    %695 = vmatpush1.msra.mxu0 0.0
    %696 = vmatprep.subr.mxu0 0.0
    %697 = vmatpush1.msra.mxu0 0.0
    %698 = vmatprep.subr.mxu0 0.0
    %699 = vmatpush1.msra.mxu0 0.0
    %700 = vmatprep.subr.mxu0 0.0
    %701 = vmatpush1.msra.mxu0 0.0
    %702 = vmatprep.subr.mxu0 0.0
    %703 = vmatpush1.msra.mxu0 0.0
    %704 = vmatprep.subr.mxu0 0.0
    %705 = vmatpush1.msra.mxu0 0.0
    %706 = vmatprep.subr.mxu0 0.0
    %707 = vmatpush1.msra.mxu0 0.0
    %708 = vmatprep.subr.mxu0 0.0
    %709 = vmatpush1.msra.mxu0 0.0
    %710 = vmatprep.subr.mxu0 0.0
    %711 = vmatpush1.msra.mxu0 0.0
    %712 = vmatprep.subr.mxu0 0.0
    %713 = vmatpush1.msra.mxu0 0.0
    %714 = vmatprep.subr.mxu0 0.0
    %715 = vmatpush1.msra.mxu0 0.0
    %716 = vmatprep.subr.mxu0 0.0
    %717 = vmatpush1.msra.mxu0 0.0
    %718 = vmatprep.subr.mxu0 0.0
    %719 = vmatpush1.msra.mxu0 0.0
    %720 = vmatprep.subr.mxu0 0.0
    %721 = vmatpush1.msra.mxu0 0.0
    %722 = vmatprep.mubr.f32.mxu0 0.0
    %723 = vmatmul.mubr.f32.gmra.mrb[0].mxu0 %v653
    %v724 = vpop.f32.mrb[0].mxu0
    %v725 = vadd.f32 %v650, %v724
    %v726 = vpop.f32.mrb[0].mxu0
    %727 = vmatprep.mubr.f32.mxu0 0.0
    %728 = vmatmul.mubr.f32.gmra.mrb[0].mxu0 %v656
    %v729 = vpop.f32.mrb[0].mxu0
    %v730 = vadd.f32 %v650, %v729
    %v731 = vpop.f32.mrb[0].mxu0
    %732 = vdwg.mxu0
    %v733 = vtanh.pop %v725
    %v734 = vtanh.pop %v730
    %v735 = vld [vmem:[%s29] sm:$0xff]
    %v736 = vld [vmem:[%s31] sm:$0x1]
    %v738 = vlaneseq
    %v739 = vshrl.u32 %v738, 7
    %v740 = vsub.s32 0, %v739
    %v741 = vrot.slane %v736, %v740
    %vm743 = vcmask 64512
    %v745 = vsel %vm743, %v733, 0
    %v748 = vsel %vm743, %v734, 0
    %750 = vmatprep.subr.mxu0 0.0
    %751 = vmatpush1.msra.mxu0 %v735
    %752 = vmatprep.subr.mxu0 0.0
    %753 = vmatpush1.msra.mxu0 0.0
    %754 = vmatprep.subr.mxu0 0.0
    %755 = vmatpush1.msra.mxu0 0.0
    %756 = vmatprep.subr.mxu0 0.0
    %757 = vmatpush1.msra.mxu0 0.0
    %758 = vmatprep.subr.mxu0 0.0
    %759 = vmatpush1.msra.mxu0 0.0
    %760 = vmatprep.subr.mxu0 0.0
    %761 = vmatpush1.msra.mxu0 0.0
    %762 = vmatprep.subr.mxu0 0.0
    %763 = vmatpush1.msra.mxu0 0.0
    %764 = vmatprep.subr.mxu0 0.0
    %765 = vmatpush1.msra.mxu0 0.0
    %766 = vmatprep.subr.mxu0 0.0
    %767 = vmatpush1.msra.mxu0 0.0
    %768 = vmatprep.subr.mxu0 0.0
    %769 = vmatpush1.msra.mxu0 0.0
    %770 = vmatprep.subr.mxu0 0.0
    %771 = vmatpush1.msra.mxu0 0.0
    %772 = vmatprep.subr.mxu0 0.0
    %773 = vmatpush1.msra.mxu0 0.0
    %774 = vmatprep.subr.mxu0 0.0
    %775 = vmatpush1.msra.mxu0 0.0
    %776 = vmatprep.subr.mxu0 0.0
    %777 = vmatpush1.msra.mxu0 0.0
    %778 = vmatprep.subr.mxu0 0.0
    %779 = vmatpush1.msra.mxu0 0.0
    %780 = vmatprep.subr.mxu0 0.0
    %781 = vmatpush1.msra.mxu0 0.0
    %782 = vmatprep.subr.mxu0 0.0
    %783 = vmatpush1.msra.mxu0 0.0
    %784 = vmatprep.subr.mxu0 0.0
    %785 = vmatpush1.msra.mxu0 0.0
    %786 = vmatprep.subr.mxu0 0.0
    %787 = vmatpush1.msra.mxu0 0.0
    %788 = vmatprep.subr.mxu0 0.0
    %789 = vmatpush1.msra.mxu0 0.0
    %790 = vmatprep.subr.mxu0 0.0
    %791 = vmatpush1.msra.mxu0 0.0
    %792 = vmatprep.subr.mxu0 0.0
    %793 = vmatpush1.msra.mxu0 0.0
    %794 = vmatprep.subr.mxu0 0.0
    %795 = vmatpush1.msra.mxu0 0.0
    %796 = vmatprep.subr.mxu0 0.0
    %797 = vmatpush1.msra.mxu0 0.0
    %798 = vmatprep.subr.mxu0 0.0
    %799 = vmatpush1.msra.mxu0 0.0
    %800 = vmatprep.subr.mxu0 0.0
    %801 = vmatpush1.msra.mxu0 0.0
    %802 = vmatprep.subr.mxu0 0.0
    %803 = vmatpush1.msra.mxu0 0.0
    %804 = vmatprep.subr.mxu0 0.0
    %805 = vmatpush1.msra.mxu0 0.0
    %806 = vmatprep.subr.mxu0 0.0
    %807 = vmatpush1.msra.mxu0 0.0
    %808 = vmatprep.subr.mxu0 0.0
    %809 = vmatpush1.msra.mxu0 0.0
    %810 = vmatprep.subr.mxu0 0.0
    %811 = vmatpush1.msra.mxu0 0.0
    %812 = vmatprep.subr.mxu0 0.0
    %813 = vmatpush1.msra.mxu0 0.0
    %814 = vmatprep.mubr.f32.mxu0 0.0
    %815 = vmatmul.mubr.f32.gmra.mrb[0].mxu0 %v745
    %v816 = vpop.f32.mrb[0].mxu0
    %v817 = vadd.f32 %v741, %v816
    %v818 = vpop.f32.mrb[0].mxu0
    %819 = vmatprep.mubr.f32.mxu0 0.0
    %820 = vmatmul.mubr.f32.gmra.mrb[0].mxu0 %v748
    %v821 = vpop.f32.mrb[0].mxu0
    %v822 = vadd.f32 %v741, %v821
    %v823 = vpop.f32.mrb[0].mxu0
    %824 = vdwg.mxu0
    %v825 = vmul.f32 %v817, %v817
    %v826 = vmul.f32 %v822, %v822
    %v827 = vmul.f32 %v817, %v825
    %v828 = vmul.f32 %v822, %v826
    %v829 = vmul.f32 %v827, 0.044715
    %v830 = vmul.f32 %v828, 0.044715
    %v831 = vadd.f32 %v817, %v829
    %v832 = vadd.f32 %v822, %v830
    %v833 = vmul.f32 %v831, 0.7978846
    %v834 = vmul.f32 %v832, 0.7978846
    %v835 = vtanh.pop %v833
    %v836 = vtanh.pop %v834
    %v837 = vadd.f32 %v835, 1.0
    %v838 = vadd.f32 %v836, 1.0
    %v839 = vmul.f32 %v837, 0.5
    %v840 = vmul.f32 %v838, 0.5
    %v841 = vmul.f32 %v817, %v839
    %v842 = vmul.f32 %v822, %v840
    %v843 = vld [vmem:[%s33] sm:$0xff]
    %v844 = vld [vmem:[%s33 + $0x8] sm:$0xff]
    %v845 = vld [vmem:[%s33 + $0x10] sm:$0xff]
    %v846 = vld [vmem:[%s33 + $0x18] sm:$0xff]
    %v847 = vld [vmem:[%s35] sm:$0x1]
    %v849 = vlaneseq
    %v850 = vshrl.u32 %v849, 7
    %v851 = vsub.s32 0, %v850
    %v852 = vrot.slane %v847, %v851
    %v855 = vsel %vm344, %v841, 0
    %v858 = vsel %vm344, %v842, 0
    %860 = vmatprep.subr.mxu0 0.0
    %861 = vmatpush1.msra.mxu0 %v843
    %862 = vmatprep.subr.mxu0 0.0
    %863 = vmatpush1.msra.mxu0 %v844
    %864 = vmatprep.subr.mxu0 0.0
    %865 = vmatpush1.msra.mxu0 %v845
    %866 = vmatprep.subr.mxu0 0.0
    %867 = vmatpush1.msra.mxu0 %v846
    %868 = vmatprep.subr.mxu0 0.0
    %869 = vmatpush1.msra.mxu0 0.0
    %870 = vmatprep.subr.mxu0 0.0
    %871 = vmatpush1.msra.mxu0 0.0
    %872 = vmatprep.subr.mxu0 0.0
    %873 = vmatpush1.msra.mxu0 0.0
    %874 = vmatprep.subr.mxu0 0.0
    %875 = vmatpush1.msra.mxu0 0.0
    %876 = vmatprep.subr.mxu0 0.0
    %877 = vmatpush1.msra.mxu0 0.0
    %878 = vmatprep.subr.mxu0 0.0
    %879 = vmatpush1.msra.mxu0 0.0
    %880 = vmatprep.subr.mxu0 0.0
    %881 = vmatpush1.msra.mxu0 0.0
    %882 = vmatprep.subr.mxu0 0.0
    %883 = vmatpush1.msra.mxu0 0.0
    %884 = vmatprep.subr.mxu0 0.0
    %885 = vmatpush1.msra.mxu0 0.0
    %886 = vmatprep.subr.mxu0 0.0
    %887 = vmatpush1.msra.mxu0 0.0
    %888 = vmatprep.subr.mxu0 0.0
    %889 = vmatpush1.msra.mxu0 0.0
    %890 = vmatprep.subr.mxu0 0.0
    %891 = vmatpush1.msra.mxu0 0.0
    %892 = vmatprep.subr.mxu0 0.0
    %893 = vmatpush1.msra.mxu0 0.0
    %894 = vmatprep.subr.mxu0 0.0
    %895 = vmatpush1.msra.mxu0 0.0
    %896 = vmatprep.subr.mxu0 0.0
    %897 = vmatpush1.msra.mxu0 0.0
    %898 = vmatprep.subr.mxu0 0.0
    %899 = vmatpush1.msra.mxu0 0.0
    %900 = vmatprep.subr.mxu0 0.0
    %901 = vmatpush1.msra.mxu0 0.0
    %902 = vmatprep.subr.mxu0 0.0
    %903 = vmatpush1.msra.mxu0 0.0
    %904 = vmatprep.subr.mxu0 0.0
    %905 = vmatpush1.msra.mxu0 0.0
    %906 = vmatprep.subr.mxu0 0.0
    %907 = vmatpush1.msra.mxu0 0.0
    %908 = vmatprep.subr.mxu0 0.0
    %909 = vmatpush1.msra.mxu0 0.0
    %910 = vmatprep.subr.mxu0 0.0
    %911 = vmatpush1.msra.mxu0 0.0
    %912 = vmatprep.subr.mxu0 0.0
    %913 = vmatpush1.msra.mxu0 0.0
    %914 = vmatprep.subr.mxu0 0.0
    %915 = vmatpush1.msra.mxu0 0.0
    %916 = vmatprep.subr.mxu0 0.0
    %917 = vmatpush1.msra.mxu0 0.0
    %918 = vmatprep.subr.mxu0 0.0
    %919 = vmatpush1.msra.mxu0 0.0
    %920 = vmatprep.subr.mxu0 0.0
    %921 = vmatpush1.msra.mxu0 0.0
    %922 = vmatprep.subr.mxu0 0.0
    %923 = vmatpush1.msra.mxu0 0.0
    %924 = vmatprep.mubr.f32.mxu0 0.0
    %925 = vmatmul.mubr.f32.gmra.mrb[0].mxu0 %v855
    %v926 = vpop.f32.mrb[0].mxu0
    %v927 = vadd.f32 %v852, %v926
    %v928 = vpop.f32.mrb[0].mxu0
    %929 = vmatprep.mubr.f32.mxu0 0.0
    %930 = vmatmul.mubr.f32.gmra.mrb[0].mxu0 %v858
    %v931 = vpop.f32.mrb[0].mxu0
    %v932 = vadd.f32 %v852, %v931
    %v933 = vpop.f32.mrb[0].mxu0
    %934 = vdwg.mxu0
    %v935 = vmul.f32 %v927, %v927
    %v936 = vmul.f32 %v932, %v932
    %v937 = vmul.f32 %v927, %v935
    %v938 = vmul.f32 %v932, %v936
    %v939 = vmul.f32 %v937, 0.044715
    %v940 = vmul.f32 %v938, 0.044715
    %v941 = vadd.f32 %v927, %v939
    %v942 = vadd.f32 %v932, %v940
    %v943 = vmul.f32 %v941, 0.7978846
    %v944 = vmul.f32 %v942, 0.7978846
    %v945 = vtanh.pop %v943
    %v946 = vtanh.pop %v944
    %v947 = vadd.f32 %v945, 1.0
    %v948 = vadd.f32 %v946, 1.0
    %v949 = vmul.f32 %v947, 0.5
    %v950 = vmul.f32 %v948, 0.5
    %v951 = vmul.f32 %v927, %v949
    %v952 = vmul.f32 %v932, %v950
    %v953 = vld [vmem:[%s37] sm:$0xff]
    %v954 = vld [vmem:[%s37 + $0x8] sm:$0xff]
    %v955 = vld [vmem:[%s37 + $0x10] sm:$0xff]
    %v956 = vld [vmem:[%s37 + $0x18] sm:$0xff]
    %v957 = vld [vmem:[%s39] sm:$0x1]
    %v959 = vlaneseq
    %v960 = vshrl.u32 %v959, 7
    %v961 = vsub.s32 0, %v960
    %v962 = vrot.slane %v957, %v961
    %v965 = vsel %vm344, %v951, 0
    %v968 = vsel %vm344, %v952, 0
    %970 = vmatprep.subr.mxu0 0.0
    %971 = vmatpush1.msra.mxu0 %v953
    %972 = vmatprep.subr.mxu0 0.0
    %973 = vmatpush1.msra.mxu0 %v954
    %974 = vmatprep.subr.mxu0 0.0
    %975 = vmatpush1.msra.mxu0 %v955
    %976 = vmatprep.subr.mxu0 0.0
    %977 = vmatpush1.msra.mxu0 %v956
    %978 = vmatprep.subr.mxu0 0.0
    %979 = vmatpush1.msra.mxu0 0.0
    %980 = vmatprep.subr.mxu0 0.0
    %981 = vmatpush1.msra.mxu0 0.0
    %982 = vmatprep.subr.mxu0 0.0
    %983 = vmatpush1.msra.mxu0 0.0
    %984 = vmatprep.subr.mxu0 0.0
    %985 = vmatpush1.msra.mxu0 0.0
    %986 = vmatprep.subr.mxu0 0.0
    %987 = vmatpush1.msra.mxu0 0.0
    %988 = vmatprep.subr.mxu0 0.0
    %989 = vmatpush1.msra.mxu0 0.0
    %990 = vmatprep.subr.mxu0 0.0
    %991 = vmatpush1.msra.mxu0 0.0
    %992 = vmatprep.subr.mxu0 0.0
    %993 = vmatpush1.msra.mxu0 0.0
    %994 = vmatprep.subr.mxu0 0.0
    %995 = vmatpush1.msra.mxu0 0.0
    %996 = vmatprep.subr.mxu0 0.0
    %997 = vmatpush1.msra.mxu0 0.0
    %998 = vmatprep.subr.mxu0 0.0
    %999 = vmatpush1.msra.mxu0 0.0
    %1000 = vmatprep.subr.mxu0 0.0
    %1001 = vmatpush1.msra.mxu0 0.0
    %1002 = vmatprep.subr.mxu0 0.0
    %1003 = vmatpush1.msra.mxu0 0.0
    %1004 = vmatprep.subr.mxu0 0.0
    %1005 = vmatpush1.msra.mxu0 0.0
    %1006 = vmatprep.subr.mxu0 0.0
    %1007 = vmatpush1.msra.mxu0 0.0
    %1008 = vmatprep.subr.mxu0 0.0
    %1009 = vmatpush1.msra.mxu0 0.0
    %1010 = vmatprep.subr.mxu0 0.0
    %1011 = vmatpush1.msra.mxu0 0.0
    %1012 = vmatprep.subr.mxu0 0.0
    %1013 = vmatpush1.msra.mxu0 0.0
    %1014 = vmatprep.subr.mxu0 0.0
    %1015 = vmatpush1.msra.mxu0 0.0
    %1016 = vmatprep.subr.mxu0 0.0
    %1017 = vmatpush1.msra.mxu0 0.0
    %1018 = vmatprep.subr.mxu0 0.0
    %1019 = vmatpush1.msra.mxu0 0.0
    %1020 = vmatprep.subr.mxu0 0.0
    %1021 = vmatpush1.msra.mxu0 0.0
    %1022 = vmatprep.subr.mxu0 0.0
    %1023 = vmatpush1.msra.mxu0 0.0
    %1024 = vmatprep.subr.mxu0 0.0
    %1025 = vmatpush1.msra.mxu0 0.0
    %1026 = vmatprep.subr.mxu0 0.0
    %1027 = vmatpush1.msra.mxu0 0.0
    %1028 = vmatprep.subr.mxu0 0.0
    %1029 = vmatpush1.msra.mxu0 0.0
    %1030 = vmatprep.subr.mxu0 0.0
    %1031 = vmatpush1.msra.mxu0 0.0
    %1032 = vmatprep.subr.mxu0 0.0
    %1033 = vmatpush1.msra.mxu0 0.0
    %1034 = vmatprep.mubr.f32.mxu0 0.0
    %1035 = vmatmul.mubr.f32.gmra.mrb[0].mxu0 %v965
    %v1036 = vpop.f32.mrb[0].mxu0
    %v1037 = vadd.f32 %v962, %v1036
    %v1038 = vpop.f32.mrb[0].mxu0
    %1039 = vmatprep.mubr.f32.mxu0 0.0
    %1040 = vmatmul.mubr.f32.gmra.mrb[0].mxu0 %v968
    %v1041 = vpop.f32.mrb[0].mxu0
    %v1042 = vadd.f32 %v962, %v1041
    %v1043 = vpop.f32.mrb[0].mxu0
    %1044 = vdwg.mxu0
    %v1045 = vtanh.pop %v1037
    %v1046 = vtanh.pop %v1042
    %v1047 = vld [vmem:[%s41] sm:$0xff]
    %v1048 = vld [vmem:[%s41 + $0x8] sm:$0xff]
    %v1049 = vld [vmem:[#allocation8] sm:$0x1]
    %v1051 = vlaneseq
    %v1052 = vshrl.u32 %v1051, 7
    %v1053 = vsub.s32 0, %v1052
    %v1054 = vrot.slane %v1049, %v1053
    %v1057 = vsel %vm262, %v1045, 0
    %v1060 = vsel %vm262, %v1046, 0
    %1062 = vmatprep.subr.mxu0 0.0
    %1063 = vmatpush1.msra.mxu0 %v1047
    %1064 = vmatprep.subr.mxu0 0.0
    %1065 = vmatpush1.msra.mxu0 %v1048
    %1066 = vmatprep.subr.mxu0 0.0
    %1067 = vmatpush1.msra.mxu0 0.0
    %1068 = vmatprep.subr.mxu0 0.0
    %1069 = vmatpush1.msra.mxu0 0.0
    %1070 = vmatprep.subr.mxu0 0.0
    %1071 = vmatpush1.msra.mxu0 0.0
    %1072 = vmatprep.subr.mxu0 0.0
    %1073 = vmatpush1.msra.mxu0 0.0
    %1074 = vmatprep.subr.mxu0 0.0
    %1075 = vmatpush1.msra.mxu0 0.0
    %1076 = vmatprep.subr.mxu0 0.0
    %1077 = vmatpush1.msra.mxu0 0.0
    %1078 = vmatprep.subr.mxu0 0.0
    %1079 = vmatpush1.msra.mxu0 0.0
    %1080 = vmatprep.subr.mxu0 0.0
    %1081 = vmatpush1.msra.mxu0 0.0
    %1082 = vmatprep.subr.mxu0 0.0
    %1083 = vmatpush1.msra.mxu0 0.0
    %1084 = vmatprep.subr.mxu0 0.0
    %1085 = vmatpush1.msra.mxu0 0.0
    %1086 = vmatprep.subr.mxu0 0.0
    %1087 = vmatpush1.msra.mxu0 0.0
    %1088 = vmatprep.subr.mxu0 0.0
    %1089 = vmatpush1.msra.mxu0 0.0
    %1090 = vmatprep.subr.mxu0 0.0
    %1091 = vmatpush1.msra.mxu0 0.0
    %1092 = vmatprep.subr.mxu0 0.0
    %1093 = vmatpush1.msra.mxu0 0.0
    %1094 = vmatprep.subr.mxu0 0.0
    %1095 = vmatpush1.msra.mxu0 0.0
    %1096 = vmatprep.subr.mxu0 0.0
    %1097 = vmatpush1.msra.mxu0 0.0
    %1098 = vmatprep.subr.mxu0 0.0
    %1099 = vmatpush1.msra.mxu0 0.0
    %1100 = vmatprep.subr.mxu0 0.0
    %1101 = vmatpush1.msra.mxu0 0.0
    %1102 = vmatprep.subr.mxu0 0.0
    %1103 = vmatpush1.msra.mxu0 0.0
    %1104 = vmatprep.subr.mxu0 0.0
    %1105 = vmatpush1.msra.mxu0 0.0
    %1106 = vmatprep.subr.mxu0 0.0
    %1107 = vmatpush1.msra.mxu0 0.0
    %1108 = vmatprep.subr.mxu0 0.0
    %1109 = vmatpush1.msra.mxu0 0.0
    %1110 = vmatprep.subr.mxu0 0.0
    %1111 = vmatpush1.msra.mxu0 0.0
    %1112 = vmatprep.subr.mxu0 0.0
    %1113 = vmatpush1.msra.mxu0 0.0
    %1114 = vmatprep.subr.mxu0 0.0
    %1115 = vmatpush1.msra.mxu0 0.0
    %1116 = vmatprep.subr.mxu0 0.0
    %1117 = vmatpush1.msra.mxu0 0.0
    %1118 = vmatprep.subr.mxu0 0.0
    %1119 = vmatpush1.msra.mxu0 0.0
    %1120 = vmatprep.subr.mxu0 0.0
    %1121 = vmatpush1.msra.mxu0 0.0
    %1122 = vmatprep.subr.mxu0 0.0
    %1123 = vmatpush1.msra.mxu0 0.0
    %1124 = vmatprep.subr.mxu0 0.0
    %1125 = vmatpush1.msra.mxu0 0.0
    %1126 = vmatprep.mubr.f32.mxu0 0.0
    %1127 = vmatmul.mubr.f32.gmra.mrb[0].mxu0 %v1057
    %v1128 = vpop.f32.mrb[0].mxu0
    %v1129 = vadd.f32 %v1054, %v1128
    %v1130 = vpop.f32.mrb[0].mxu0
    %1131 = vmatprep.mubr.f32.mxu0 0.0
    %1132 = vmatmul.mubr.f32.gmra.mrb[0].mxu0 %v1060
    %v1133 = vpop.f32.mrb[0].mxu0
    %v1134 = vadd.f32 %v1054, %v1133
    %v1135 = vpop.f32.mrb[0].mxu0
    %1136 = vdwg.mxu0
    %v1137 = vld [vmem:[%s45] sm:$0xff]
    %v1138 = vld [vmem:[%s45 + $0x8] sm:$0xff]
    %v1139 = vld [vmem:[#allocation9] sm:$0x1]
    %v1141 = vlaneseq
    %v1142 = vshrl.u32 %v1141, 7
    %v1143 = vsub.s32 0, %v1142
    %v1144 = vrot.slane %v1139, %v1143
    %1146 = vmatprep.subr.mxu0 0.0
    %1147 = vmatpush1.msra.mxu0 %v1137
    %1148 = vmatprep.subr.mxu0 0.0
    %1149 = vmatpush1.msra.mxu0 %v1138
    %1150 = vmatprep.subr.mxu0 0.0
    %1151 = vmatpush1.msra.mxu0 0.0
    %1152 = vmatprep.subr.mxu0 0.0
    %1153 = vmatpush1.msra.mxu0 0.0
    %1154 = vmatprep.subr.mxu0 0.0
    %1155 = vmatpush1.msra.mxu0 0.0
    %1156 = vmatprep.subr.mxu0 0.0
    %1157 = vmatpush1.msra.mxu0 0.0
    %1158 = vmatprep.subr.mxu0 0.0
    %1159 = vmatpush1.msra.mxu0 0.0
    %1160 = vmatprep.subr.mxu0 0.0
    %1161 = vmatpush1.msra.mxu0 0.0
    %1162 = vmatprep.subr.mxu0 0.0
    %1163 = vmatpush1.msra.mxu0 0.0
    %1164 = vmatprep.subr.mxu0 0.0
    %1165 = vmatpush1.msra.mxu0 0.0
    %1166 = vmatprep.subr.mxu0 0.0
    %1167 = vmatpush1.msra.mxu0 0.0
    %1168 = vmatprep.subr.mxu0 0.0
    %1169 = vmatpush1.msra.mxu0 0.0
    %1170 = vmatprep.subr.mxu0 0.0
    %1171 = vmatpush1.msra.mxu0 0.0
    %1172 = vmatprep.subr.mxu0 0.0
    %1173 = vmatpush1.msra.mxu0 0.0
    %1174 = vmatprep.subr.mxu0 0.0
    %1175 = vmatpush1.msra.mxu0 0.0
    %1176 = vmatprep.subr.mxu0 0.0
    %1177 = vmatpush1.msra.mxu0 0.0
    %1178 = vmatprep.subr.mxu0 0.0
    %1179 = vmatpush1.msra.mxu0 0.0
    %1180 = vmatprep.subr.mxu0 0.0
    %1181 = vmatpush1.msra.mxu0 0.0
    %1182 = vmatprep.subr.mxu0 0.0
    %1183 = vmatpush1.msra.mxu0 0.0
    %1184 = vmatprep.subr.mxu0 0.0
    %1185 = vmatpush1.msra.mxu0 0.0
    %1186 = vmatprep.subr.mxu0 0.0
    %1187 = vmatpush1.msra.mxu0 0.0
    %1188 = vmatprep.subr.mxu0 0.0
    %1189 = vmatpush1.msra.mxu0 0.0
    %1190 = vmatprep.subr.mxu0 0.0
    %1191 = vmatpush1.msra.mxu0 0.0
    %1192 = vmatprep.subr.mxu0 0.0
    %1193 = vmatpush1.msra.mxu0 0.0
    %1194 = vmatprep.subr.mxu0 0.0
    %1195 = vmatpush1.msra.mxu0 0.0
    %1196 = vmatprep.subr.mxu0 0.0
    %1197 = vmatpush1.msra.mxu0 0.0
    %1198 = vmatprep.subr.mxu0 0.0
    %1199 = vmatpush1.msra.mxu0 0.0
    %1200 = vmatprep.subr.mxu0 0.0
    %1201 = vmatpush1.msra.mxu0 0.0
    %1202 = vmatprep.subr.mxu0 0.0
    %1203 = vmatpush1.msra.mxu0 0.0
    %1204 = vmatprep.subr.mxu0 0.0
    %1205 = vmatpush1.msra.mxu0 0.0
    %1206 = vmatprep.subr.mxu0 0.0
    %1207 = vmatpush1.msra.mxu0 0.0
    %1208 = vmatprep.subr.mxu0 0.0
    %1209 = vmatpush1.msra.mxu0 0.0
    %1210 = vmatprep.mubr.f32.mxu0 0.0
    %1211 = vmatmul.mubr.f32.gmra.mrb[0].mxu0 %v1057
    %v1212 = vpop.f32.mrb[0].mxu0
    %v1213 = vadd.f32 %v1144, %v1212
    %v1214 = vpop.f32.mrb[0].mxu0
    %1215 = vmatprep.mubr.f32.mxu0 0.0
    %1216 = vmatmul.mubr.f32.gmra.mrb[0].mxu0 %v1060
    %v1217 = vpop.f32.mrb[0].mxu0
    %v1218 = vadd.f32 %v1144, %v1217
    %v1219 = vpop.f32.mrb[0].mxu0
    %1220 = vdwg.mxu0
    %v1221 = vld [vmem:[%s49] sm:$0xff]
    %v1222 = vld [vmem:[%s49 + $0x8] sm:$0xff]
    %v1223 = vld [vmem:[%s49 + $0x10] sm:$0xff]
    %v1224 = vld [vmem:[%s49 + $0x18] sm:$0xff]
    %v1225 = vld [vmem:[#allocation11] sm:$0x1]
    %v1227 = vlaneseq
    %v1228 = vshrl.u32 %v1227, 7
    %v1229 = vsub.s32 0, %v1228
    %v1230 = vrot.slane %v1225, %v1229
    %v1233 = vsel %vm344, %v1129, 0
    %v1236 = vsel %vm344, %v1134, 0
    %1238 = vmatprep.subr.mxu0 0.0
    %1239 = vmatpush1.msra.mxu0 %v1221
    %1240 = vmatprep.subr.mxu0 0.0
    %1241 = vmatpush1.msra.mxu0 %v1222
    %1242 = vmatprep.subr.mxu0 0.0
    %1243 = vmatpush1.msra.mxu0 %v1223
    %1244 = vmatprep.subr.mxu0 0.0
    %1245 = vmatpush1.msra.mxu0 %v1224
    %1246 = vmatprep.subr.mxu0 0.0
    %1247 = vmatpush1.msra.mxu0 0.0
    %1248 = vmatprep.subr.mxu0 0.0
    %1249 = vmatpush1.msra.mxu0 0.0
    %1250 = vmatprep.subr.mxu0 0.0
    %1251 = vmatpush1.msra.mxu0 0.0
    %1252 = vmatprep.subr.mxu0 0.0
    %1253 = vmatpush1.msra.mxu0 0.0
    %1254 = vmatprep.subr.mxu0 0.0
    %1255 = vmatpush1.msra.mxu0 0.0
    %1256 = vmatprep.subr.mxu0 0.0
    %1257 = vmatpush1.msra.mxu0 0.0
    %1258 = vmatprep.subr.mxu0 0.0
    %1259 = vmatpush1.msra.mxu0 0.0
    %1260 = vmatprep.subr.mxu0 0.0
    %1261 = vmatpush1.msra.mxu0 0.0
    %1262 = vmatprep.subr.mxu0 0.0
    %1263 = vmatpush1.msra.mxu0 0.0
    %1264 = vmatprep.subr.mxu0 0.0
    %1265 = vmatpush1.msra.mxu0 0.0
    %1266 = vmatprep.subr.mxu0 0.0
    %1267 = vmatpush1.msra.mxu0 0.0
    %1268 = vmatprep.subr.mxu0 0.0
    %1269 = vmatpush1.msra.mxu0 0.0
    %1270 = vmatprep.subr.mxu0 0.0
    %1271 = vmatpush1.msra.mxu0 0.0
    %1272 = vmatprep.subr.mxu0 0.0
    %1273 = vmatpush1.msra.mxu0 0.0
    %1274 = vmatprep.subr.mxu0 0.0
    %1275 = vmatpush1.msra.mxu0 0.0
    %1276 = vmatprep.subr.mxu0 0.0
    %1277 = vmatpush1.msra.mxu0 0.0
    %1278 = vmatprep.subr.mxu0 0.0
    %1279 = vmatpush1.msra.mxu0 0.0
    %1280 = vmatprep.subr.mxu0 0.0
    %1281 = vmatpush1.msra.mxu0 0.0
    %1282 = vmatprep.subr.mxu0 0.0
    %1283 = vmatpush1.msra.mxu0 0.0
    %1284 = vmatprep.subr.mxu0 0.0
    %1285 = vmatpush1.msra.mxu0 0.0
    %1286 = vmatprep.subr.mxu0 0.0
    %1287 = vmatpush1.msra.mxu0 0.0
    %1288 = vmatprep.subr.mxu0 0.0
    %1289 = vmatpush1.msra.mxu0 0.0
    %1290 = vmatprep.subr.mxu0 0.0
    %1291 = vmatpush1.msra.mxu0 0.0
    %1292 = vmatprep.subr.mxu0 0.0
    %1293 = vmatpush1.msra.mxu0 0.0
    %1294 = vmatprep.subr.mxu0 0.0
    %1295 = vmatpush1.msra.mxu0 0.0
    %1296 = vmatprep.subr.mxu0 0.0
    %1297 = vmatpush1.msra.mxu0 0.0
    %1298 = vmatprep.subr.mxu0 0.0
    %1299 = vmatpush1.msra.mxu0 0.0
    %1300 = vmatprep.subr.mxu0 0.0
    %1301 = vmatpush1.msra.mxu0 0.0
    %1302 = vmatprep.mubr.f32.mxu0 0.0
    %1303 = vmatmul.mubr.f32.gmra.mrb[0].mxu0 %v1233
    %v1304 = vpop.f32.mrb[0].mxu0
    %v1305 = vadd.f32 %v1230, %v1304
    %v1306 = vpop.f32.mrb[0].mxu0
    %1307 = vmatprep.mubr.f32.mxu0 0.0
    %1308 = vmatmul.mubr.f32.gmra.mrb[0].mxu0 %v1236
    %v1309 = vpop.f32.mrb[0].mxu0
    %v1310 = vadd.f32 %v1230, %v1309
    %v1311 = vpop.f32.mrb[0].mxu0
    %1312 = vdwg.mxu0
    %v1313 = vtanh.pop %v1305
    %v1314 = vtanh.pop %v1310
    %v1315 = vld [vmem:[%s53] sm:$0xff]
    %v1316 = vld [vmem:[%s53 + $0x8] sm:$0xff]
    %v1317 = vld [vmem:[%s53 + $0x10] sm:$0xff]
    %v1318 = vld [vmem:[%s53 + $0x18] sm:$0xff]
    %v1319 = vld [vmem:[#allocation12] sm:$0x1]
    %v1321 = vlaneseq
    %v1322 = vshrl.u32 %v1321, 7
    %v1323 = vsub.s32 0, %v1322
    %v1324 = vrot.slane %v1319, %v1323
    %v1327 = vsel %vm344, %v1313, 0
    %v1330 = vsel %vm344, %v1314, 0
    %1332 = vmatprep.subr.mxu0 0.0
    %1333 = vmatpush1.msra.mxu0 %v1315
    %1334 = vmatprep.subr.mxu0 0.0
    %1335 = vmatpush1.msra.mxu0 %v1316
    %1336 = vmatprep.subr.mxu0 0.0
    %1337 = vmatpush1.msra.mxu0 %v1317
    %1338 = vmatprep.subr.mxu0 0.0
    %1339 = vmatpush1.msra.mxu0 %v1318
    %1340 = vmatprep.subr.mxu0 0.0
    %1341 = vmatpush1.msra.mxu0 0.0
    %1342 = vmatprep.subr.mxu0 0.0
    %1343 = vmatpush1.msra.mxu0 0.0
    %1344 = vmatprep.subr.mxu0 0.0
    %1345 = vmatpush1.msra.mxu0 0.0
    %1346 = vmatprep.subr.mxu0 0.0
    %1347 = vmatpush1.msra.mxu0 0.0
    %1348 = vmatprep.subr.mxu0 0.0
    %1349 = vmatpush1.msra.mxu0 0.0
    %1350 = vmatprep.subr.mxu0 0.0
    %1351 = vmatpush1.msra.mxu0 0.0
    %1352 = vmatprep.subr.mxu0 0.0
    %1353 = vmatpush1.msra.mxu0 0.0
    %1354 = vmatprep.subr.mxu0 0.0
    %1355 = vmatpush1.msra.mxu0 0.0
    %1356 = vmatprep.subr.mxu0 0.0
    %1357 = vmatpush1.msra.mxu0 0.0
    %1358 = vmatprep.subr.mxu0 0.0
    %1359 = vmatpush1.msra.mxu0 0.0
    %1360 = vmatprep.subr.mxu0 0.0
    %1361 = vmatpush1.msra.mxu0 0.0
    %1362 = vmatprep.subr.mxu0 0.0
    %1363 = vmatpush1.msra.mxu0 0.0
    %1364 = vmatprep.subr.mxu0 0.0
    %1365 = vmatpush1.msra.mxu0 0.0
    %1366 = vmatprep.subr.mxu0 0.0
    %1367 = vmatpush1.msra.mxu0 0.0
    %1368 = vmatprep.subr.mxu0 0.0
    %1369 = vmatpush1.msra.mxu0 0.0
    %1370 = vmatprep.subr.mxu0 0.0
    %1371 = vmatpush1.msra.mxu0 0.0
    %1372 = vmatprep.subr.mxu0 0.0
    %1373 = vmatpush1.msra.mxu0 0.0
    %1374 = vmatprep.subr.mxu0 0.0
    %1375 = vmatpush1.msra.mxu0 0.0
    %1376 = vmatprep.subr.mxu0 0.0
    %1377 = vmatpush1.msra.mxu0 0.0
    %1378 = vmatprep.subr.mxu0 0.0
    %1379 = vmatpush1.msra.mxu0 0.0
    %1380 = vmatprep.subr.mxu0 0.0
    %1381 = vmatpush1.msra.mxu0 0.0
    %1382 = vmatprep.subr.mxu0 0.0
    %1383 = vmatpush1.msra.mxu0 0.0
    %1384 = vmatprep.subr.mxu0 0.0
    %1385 = vmatpush1.msra.mxu0 0.0
    %1386 = vmatprep.subr.mxu0 0.0
    %1387 = vmatpush1.msra.mxu0 0.0
    %1388 = vmatprep.subr.mxu0 0.0
    %1389 = vmatpush1.msra.mxu0 0.0
    %1390 = vmatprep.subr.mxu0 0.0
    %1391 = vmatpush1.msra.mxu0 0.0
    %1392 = vmatprep.subr.mxu0 0.0
    %1393 = vmatpush1.msra.mxu0 0.0
    %1394 = vmatprep.subr.mxu0 0.0
    %1395 = vmatpush1.msra.mxu0 0.0
    %1396 = vmatprep.mubr.f32.mxu0 0.0
    %1397 = vmatmul.mubr.f32.gmra.mrb[0].mxu0 %v1327
    %v1398 = vpop.f32.mrb[0].mxu0
    %v1399 = vadd.f32 %v1324, %v1398
    %v1400 = vpop.f32.mrb[0].mxu0
    %1401 = vmatprep.mubr.f32.mxu0 0.0
    %1402 = vmatmul.mubr.f32.gmra.mrb[0].mxu0 %v1330
    %v1403 = vpop.f32.mrb[0].mxu0
    %v1404 = vadd.f32 %v1324, %v1403
    %v1405 = vpop.f32.mrb[0].mxu0
    %1406 = vdwg.mxu0
    %v1407 = vld [vmem:[%s57] sm:$0xff]
    %v1408 = vld [vmem:[%s57 + $0x8] sm:$0xff]
    %v1409 = vld [vmem:[%s57 + $0x10] sm:$0xff]
    %v1410 = vld [vmem:[%s57 + $0x18] sm:$0xff]
    %v1411 = vld [vmem:[#allocation14] sm:$0x1]
    %v1413 = vlaneseq
    %v1414 = vshrl.u32 %v1413, 7
    %v1415 = vsub.s32 0, %v1414
    %v1416 = vrot.slane %v1411, %v1415
    %v1419 = vsel %vm344, %v1213, 0
    %v1422 = vsel %vm344, %v1218, 0
    %1424 = vmatprep.subr.mxu0 0.0
    %1425 = vmatpush1.msra.mxu0 %v1407
    %1426 = vmatprep.subr.mxu0 0.0
    %1427 = vmatpush1.msra.mxu0 %v1408
    %1428 = vmatprep.subr.mxu0 0.0
    %1429 = vmatpush1.msra.mxu0 %v1409
    %1430 = vmatprep.subr.mxu0 0.0
    %1431 = vmatpush1.msra.mxu0 %v1410
    %1432 = vmatprep.subr.mxu0 0.0
    %1433 = vmatpush1.msra.mxu0 0.0
    %1434 = vmatprep.subr.mxu0 0.0
    %1435 = vmatpush1.msra.mxu0 0.0
    %1436 = vmatprep.subr.mxu0 0.0
    %1437 = vmatpush1.msra.mxu0 0.0
    %1438 = vmatprep.subr.mxu0 0.0
    %1439 = vmatpush1.msra.mxu0 0.0
    %1440 = vmatprep.subr.mxu0 0.0
    %1441 = vmatpush1.msra.mxu0 0.0
    %1442 = vmatprep.subr.mxu0 0.0
    %1443 = vmatpush1.msra.mxu0 0.0
    %1444 = vmatprep.subr.mxu0 0.0
    %1445 = vmatpush1.msra.mxu0 0.0
    %1446 = vmatprep.subr.mxu0 0.0
    %1447 = vmatpush1.msra.mxu0 0.0
    %1448 = vmatprep.subr.mxu0 0.0
    %1449 = vmatpush1.msra.mxu0 0.0
    %1450 = vmatprep.subr.mxu0 0.0
    %1451 = vmatpush1.msra.mxu0 0.0
    %1452 = vmatprep.subr.mxu0 0.0
    %1453 = vmatpush1.msra.mxu0 0.0
    %1454 = vmatprep.subr.mxu0 0.0
    %1455 = vmatpush1.msra.mxu0 0.0
    %1456 = vmatprep.subr.mxu0 0.0
    %1457 = vmatpush1.msra.mxu0 0.0
    %1458 = vmatprep.subr.mxu0 0.0
    %1459 = vmatpush1.msra.mxu0 0.0
    %1460 = vmatprep.subr.mxu0 0.0
    %1461 = vmatpush1.msra.mxu0 0.0
    %1462 = vmatprep.subr.mxu0 0.0
    %1463 = vmatpush1.msra.mxu0 0.0
    %1464 = vmatprep.subr.mxu0 0.0
    %1465 = vmatpush1.msra.mxu0 0.0
    %1466 = vmatprep.subr.mxu0 0.0
    %1467 = vmatpush1.msra.mxu0 0.0
    %1468 = vmatprep.subr.mxu0 0.0
    %1469 = vmatpush1.msra.mxu0 0.0
    %1470 = vmatprep.subr.mxu0 0.0
    %1471 = vmatpush1.msra.mxu0 0.0
    %1472 = vmatprep.subr.mxu0 0.0
    %1473 = vmatpush1.msra.mxu0 0.0
    %1474 = vmatprep.subr.mxu0 0.0
    %1475 = vmatpush1.msra.mxu0 0.0
    %1476 = vmatprep.subr.mxu0 0.0
    %1477 = vmatpush1.msra.mxu0 0.0
    %1478 = vmatprep.subr.mxu0 0.0
    %1479 = vmatpush1.msra.mxu0 0.0
    %1480 = vmatprep.subr.mxu0 0.0
    %1481 = vmatpush1.msra.mxu0 0.0
    %1482 = vmatprep.subr.mxu0 0.0
    %1483 = vmatpush1.msra.mxu0 0.0
    %1484 = vmatprep.subr.mxu0 0.0
    %1485 = vmatpush1.msra.mxu0 0.0
    %1486 = vmatprep.subr.mxu0 0.0
    %1487 = vmatpush1.msra.mxu0 0.0
    %1488 = vmatprep.mubr.f32.mxu0 0.0
    %1489 = vmatmul.mubr.f32.gmra.mrb[0].mxu0 %v1419
    %v1490 = vpop.f32.mrb[0].mxu0
    %v1491 = vadd.f32 %v1416, %v1490
    %v1492 = vpop.f32.mrb[0].mxu0
    %1493 = vmatprep.mubr.f32.mxu0 0.0
    %1494 = vmatmul.mubr.f32.gmra.mrb[0].mxu0 %v1422
    %v1495 = vpop.f32.mrb[0].mxu0
    %v1496 = vadd.f32 %v1416, %v1495
    %v1497 = vpop.f32.mrb[0].mxu0
    %1498 = vdwg.mxu0
    %v1499 = vtanh.pop %v1491
    %v1500 = vtanh.pop %v1496
    %v1501 = vld [vmem:[%s61] sm:$0xff]
    %v1502 = vld [vmem:[%s61 + $0x8] sm:$0xff]
    %v1503 = vld [vmem:[%s61 + $0x10] sm:$0xff]
    %v1504 = vld [vmem:[%s61 + $0x18] sm:$0xff]
    %v1505 = vld [vmem:[%s63] sm:$0x1]
    %v1507 = vlaneseq
    %v1508 = vshrl.u32 %v1507, 7
    %v1509 = vsub.s32 0, %v1508
    %v1510 = vrot.slane %v1505, %v1509
    %v1513 = vsel %vm344, %v1499, 0
    %v1516 = vsel %vm344, %v1500, 0
    %1518 = vmatprep.subr.mxu0 0.0
    %1519 = vmatpush1.msra.mxu0 %v1501
    %1520 = vmatprep.subr.mxu0 0.0
    %1521 = vmatpush1.msra.mxu0 %v1502
    %1522 = vmatprep.subr.mxu0 0.0
    %1523 = vmatpush1.msra.mxu0 %v1503
    %1524 = vmatprep.subr.mxu0 0.0
    %1525 = vmatpush1.msra.mxu0 %v1504
    %1526 = vmatprep.subr.mxu0 0.0
    %1527 = vmatpush1.msra.mxu0 0.0
    %1528 = vmatprep.subr.mxu0 0.0
    %1529 = vmatpush1.msra.mxu0 0.0
    %1530 = vmatprep.subr.mxu0 0.0
    %1531 = vmatpush1.msra.mxu0 0.0
    %1532 = vmatprep.subr.mxu0 0.0
    %1533 = vmatpush1.msra.mxu0 0.0
    %1534 = vmatprep.subr.mxu0 0.0
    %1535 = vmatpush1.msra.mxu0 0.0
    %1536 = vmatprep.subr.mxu0 0.0
    %1537 = vmatpush1.msra.mxu0 0.0
    %1538 = vmatprep.subr.mxu0 0.0
    %1539 = vmatpush1.msra.mxu0 0.0
    %1540 = vmatprep.subr.mxu0 0.0
    %1541 = vmatpush1.msra.mxu0 0.0
    %1542 = vmatprep.subr.mxu0 0.0
    %1543 = vmatpush1.msra.mxu0 0.0
    %1544 = vmatprep.subr.mxu0 0.0
    %1545 = vmatpush1.msra.mxu0 0.0
    %1546 = vmatprep.subr.mxu0 0.0
    %1547 = vmatpush1.msra.mxu0 0.0
    %1548 = vmatprep.subr.mxu0 0.0
    %1549 = vmatpush1.msra.mxu0 0.0
    %1550 = vmatprep.subr.mxu0 0.0
    %1551 = vmatpush1.msra.mxu0 0.0
    %1552 = vmatprep.subr.mxu0 0.0
    %1553 = vmatpush1.msra.mxu0 0.0
    %1554 = vmatprep.subr.mxu0 0.0
    %1555 = vmatpush1.msra.mxu0 0.0
    %1556 = vmatprep.subr.mxu0 0.0
    %1557 = vmatpush1.msra.mxu0 0.0
    %1558 = vmatprep.subr.mxu0 0.0
    %1559 = vmatpush1.msra.mxu0 0.0
    %1560 = vmatprep.subr.mxu0 0.0
    %1561 = vmatpush1.msra.mxu0 0.0
    %1562 = vmatprep.subr.mxu0 0.0
    %1563 = vmatpush1.msra.mxu0 0.0
    %1564 = vmatprep.subr.mxu0 0.0
    %1565 = vmatpush1.msra.mxu0 0.0
    %1566 = vmatprep.subr.mxu0 0.0
    %1567 = vmatpush1.msra.mxu0 0.0
    %1568 = vmatprep.subr.mxu0 0.0
    %1569 = vmatpush1.msra.mxu0 0.0
    %1570 = vmatprep.subr.mxu0 0.0
    %1571 = vmatpush1.msra.mxu0 0.0
    %1572 = vmatprep.subr.mxu0 0.0
    %1573 = vmatpush1.msra.mxu0 0.0
    %1574 = vmatprep.subr.mxu0 0.0
    %1575 = vmatpush1.msra.mxu0 0.0
    %1576 = vmatprep.subr.mxu0 0.0
    %1577 = vmatpush1.msra.mxu0 0.0
    %1578 = vmatprep.subr.mxu0 0.0
    %1579 = vmatpush1.msra.mxu0 0.0
    %1580 = vmatprep.subr.mxu0 0.0
    %1581 = vmatpush1.msra.mxu0 0.0
    %1582 = vmatprep.mubr.f32.mxu0 0.0
    %1583 = vmatmul.mubr.f32.gmra.mrb[0].mxu0 %v1513
    %v1584 = vpop.f32.mrb[0].mxu0
    %v1585 = vadd.f32 %v1510, %v1584
    %v1586 = vpop.f32.mrb[0].mxu0
    %1587 = vmatprep.mubr.f32.mxu0 0.0
    %1588 = vmatmul.mubr.f32.gmra.mrb[0].mxu0 %v1516
    %v1589 = vpop.f32.mrb[0].mxu0
    %v1590 = vadd.f32 %v1510, %v1589
    %v1591 = vpop.f32.mrb[0].mxu0
    %1592 = vdwg.mxu0
    %v1593 = vld [vmem:[%s65] sm:$0xff]
    %v1594 = vld [vmem:[%s65 + $0x8] sm:$0xff]
    %v1595 = vld [vmem:[%s67] sm:$0xff]
    %v1596 = vld [vmem:[%s67 + $0x8] sm:$0xff]
    %v1597 = vld [vmem:[%s67 + $0x10] sm:$0xff]
    %v1598 = vld [vmem:[%s67 + $0x18] sm:$0xff]
    %1599 = vmatprep.subr.mxu0 0.0
    %1600 = vmatpush1.msra.mxu0 %v1595
    %1601 = vmatprep.subr.mxu0 0.0
    %1602 = vmatpush1.msra.mxu0 %v1596
    %1603 = vmatprep.subr.mxu0 0.0
    %1604 = vmatpush1.msra.mxu0 %v1597
    %1605 = vmatprep.subr.mxu0 0.0
    %1606 = vmatpush1.msra.mxu0 %v1598
    %1607 = vmatprep.subr.mxu0 0.0
    %1608 = vmatpush1.msra.mxu0 0.0
    %1609 = vmatprep.subr.mxu0 0.0
    %1610 = vmatpush1.msra.mxu0 0.0
    %1611 = vmatprep.subr.mxu0 0.0
    %1612 = vmatpush1.msra.mxu0 0.0
    %1613 = vmatprep.subr.mxu0 0.0
    %1614 = vmatpush1.msra.mxu0 0.0
    %1615 = vmatprep.subr.mxu0 0.0
    %1616 = vmatpush1.msra.mxu0 0.0
    %1617 = vmatprep.subr.mxu0 0.0
    %1618 = vmatpush1.msra.mxu0 0.0
    %1619 = vmatprep.subr.mxu0 0.0
    %1620 = vmatpush1.msra.mxu0 0.0
    %1621 = vmatprep.subr.mxu0 0.0
    %1622 = vmatpush1.msra.mxu0 0.0
    %1623 = vmatprep.subr.mxu0 0.0
    %1624 = vmatpush1.msra.mxu0 0.0
    %1625 = vmatprep.subr.mxu0 0.0
    %1626 = vmatpush1.msra.mxu0 0.0
    %1627 = vmatprep.subr.mxu0 0.0
    %1628 = vmatpush1.msra.mxu0 0.0
    %1629 = vmatprep.subr.mxu0 0.0
    %1630 = vmatpush1.msra.mxu0 0.0
    %1631 = vmatprep.subr.mxu0 0.0
    %1632 = vmatpush1.msra.mxu0 0.0
    %1633 = vmatprep.subr.mxu0 0.0
    %1634 = vmatpush1.msra.mxu0 0.0
    %1635 = vmatprep.subr.mxu0 0.0
    %1636 = vmatpush1.msra.mxu0 0.0
    %1637 = vmatprep.subr.mxu0 0.0
    %1638 = vmatpush1.msra.mxu0 0.0
    %1639 = vmatprep.subr.mxu0 0.0
    %1640 = vmatpush1.msra.mxu0 0.0
    %1641 = vmatprep.subr.mxu0 0.0
    %1642 = vmatpush1.msra.mxu0 0.0
    %1643 = vmatprep.subr.mxu0 0.0
    %1644 = vmatpush1.msra.mxu0 0.0
    %1645 = vmatprep.subr.mxu0 0.0
    %1646 = vmatpush1.msra.mxu0 0.0
    %1647 = vmatprep.subr.mxu0 0.0
    %1648 = vmatpush1.msra.mxu0 0.0
    %1649 = vmatprep.subr.mxu0 0.0
    %1650 = vmatpush1.msra.mxu0 0.0
    %1651 = vmatprep.subr.mxu0 0.0
    %1652 = vmatpush1.msra.mxu0 0.0
    %1653 = vmatprep.subr.mxu0 0.0
    %1654 = vmatpush1.msra.mxu0 0.0
    %1655 = vmatprep.subr.mxu0 0.0
    %1656 = vmatpush1.msra.mxu0 0.0
    %1657 = vmatprep.subr.mxu0 0.0
    %1658 = vmatpush1.msra.mxu0 0.0
    %1659 = vmatprep.subr.mxu0 0.0
    %1660 = vmatpush1.msra.mxu0 0.0
    %1661 = vmatprep.subr.mxu0 0.0
    %1662 = vmatpush1.msra.mxu0 0.0
    %1663 = vmatprep.mubr.f32.mxu0 0.0
    %1664 = vmatmul.mubr.f32.gmra.mrb[0].mxu0 %v1419
    %v1665 = vpop.f32.mrb[0].mxu0
    %v1666 = vadd.f32 0.0, %v1665
    %v1667 = vpop.f32.mrb[0].mxu0
    %1668 = vmatprep.mubr.f32.mxu0 0.0
    %1669 = vmatmul.mubr.f32.gmra.mrb[0].mxu0 %v1422
    %v1670 = vpop.f32.mrb[0].mxu0
    %v1671 = vadd.f32 0.0, %v1670
    %v1672 = vpop.f32.mrb[0].mxu0
    %1673 = vdwg.mxu0
    %1674 = vmatprep.subr.mxu0 0.0
    %1675 = vmatpush1.msra.mxu0 %v1593
    %1676 = vmatprep.subr.mxu0 0.0
    %1677 = vmatpush1.msra.mxu0 %v1594
    %1678 = vmatprep.subr.mxu0 0.0
    %1679 = vmatpush1.msra.mxu0 0.0
    %1680 = vmatprep.subr.mxu0 0.0
    %1681 = vmatpush1.msra.mxu0 0.0
    %1682 = vmatprep.subr.mxu0 0.0
    %1683 = vmatpush1.msra.mxu0 0.0
    %1684 = vmatprep.subr.mxu0 0.0
    %1685 = vmatpush1.msra.mxu0 0.0
    %1686 = vmatprep.subr.mxu0 0.0
    %1687 = vmatpush1.msra.mxu0 0.0
    %1688 = vmatprep.subr.mxu0 0.0
    %1689 = vmatpush1.msra.mxu0 0.0
    %1690 = vmatprep.subr.mxu0 0.0
    %1691 = vmatpush1.msra.mxu0 0.0
    %1692 = vmatprep.subr.mxu0 0.0
    %1693 = vmatpush1.msra.mxu0 0.0
    %1694 = vmatprep.subr.mxu0 0.0
    %1695 = vmatpush1.msra.mxu0 0.0
    %1696 = vmatprep.subr.mxu0 0.0
    %1697 = vmatpush1.msra.mxu0 0.0
    %1698 = vmatprep.subr.mxu0 0.0
    %1699 = vmatpush1.msra.mxu0 0.0
    %1700 = vmatprep.subr.mxu0 0.0
    %1701 = vmatpush1.msra.mxu0 0.0
    %1702 = vmatprep.subr.mxu0 0.0
    %1703 = vmatpush1.msra.mxu0 0.0
    %1704 = vmatprep.subr.mxu0 0.0
    %1705 = vmatpush1.msra.mxu0 0.0
    %1706 = vmatprep.subr.mxu0 0.0
    %1707 = vmatpush1.msra.mxu0 0.0
    %1708 = vmatprep.subr.mxu0 0.0
    %1709 = vmatpush1.msra.mxu0 0.0
    %1710 = vmatprep.subr.mxu0 0.0
    %1711 = vmatpush1.msra.mxu0 0.0
    %1712 = vmatprep.subr.mxu0 0.0
    %1713 = vmatpush1.msra.mxu0 0.0
    %1714 = vmatprep.subr.mxu0 0.0
    %1715 = vmatpush1.msra.mxu0 0.0
    %1716 = vmatprep.subr.mxu0 0.0
    %1717 = vmatpush1.msra.mxu0 0.0
    %1718 = vmatprep.subr.mxu0 0.0
    %1719 = vmatpush1.msra.mxu0 0.0
    %1720 = vmatprep.subr.mxu0 0.0
    %1721 = vmatpush1.msra.mxu0 0.0
    %1722 = vmatprep.subr.mxu0 0.0
    %1723 = vmatpush1.msra.mxu0 0.0
    %1724 = vmatprep.subr.mxu0 0.0
    %1725 = vmatpush1.msra.mxu0 0.0
    %1726 = vmatprep.subr.mxu0 0.0
    %1727 = vmatpush1.msra.mxu0 0.0
    %1728 = vmatprep.subr.mxu0 0.0
    %1729 = vmatpush1.msra.mxu0 0.0
    %1730 = vmatprep.subr.mxu0 0.0
    %1731 = vmatpush1.msra.mxu0 0.0
    %1732 = vmatprep.subr.mxu0 0.0
    %1733 = vmatpush1.msra.mxu0 0.0
    %1734 = vmatprep.subr.mxu0 0.0
    %1735 = vmatpush1.msra.mxu0 0.0
    %1736 = vmatprep.subr.mxu0 0.0
    %1737 = vmatpush1.msra.mxu0 0.0
    %1738 = vmatprep.mubr.f32.mxu0 0.0
    %1739 = vmatmul.mubr.f32.gmra.mrb[0].mxu0 %v1057
    %v1740 = vpop.f32.mrb[0].mxu0
    %v1741 = vadd.f32 %v1666, %v1740
    %v1742 = vpop.f32.mrb[0].mxu0
    %1743 = vmatprep.mubr.f32.mxu0 0.0
    %1744 = vmatmul.mubr.f32.gmra.mrb[0].mxu0 %v1060
    %v1745 = vpop.f32.mrb[0].mxu0
    %v1746 = vadd.f32 %v1671, %v1745
    %v1747 = vpop.f32.mrb[0].mxu0
    %1748 = vdwg.mxu0
    %v1749 = vld [vmem:[%s69] sm:$0x1]
    %v1751 = vlaneseq
    %v1752 = vshrl.u32 %v1751, 7
    %v1753 = vsub.s32 0, %v1752
    %v1754 = vrot.slane %v1749, %v1753
    %v1756 = vadd.f32 %v1741, %v1754
    %v1757 = vadd.f32 %v1746, %v1754
    %v1758 = vsel %vm262, %v1756, 0.0
    %1759 = vadd.xlane.f32.xlu0 %v1758
    %v1760 = vpop.xlane.xlu0 %1759
    %v1761 = vsel %vm262, %v1757, 0.0
    %1762 = vadd.xlane.f32.xlu0 %v1761
    %v1763 = vpop.xlane.xlu0 %1762
    %v1764 = vrcp.pop 16.0
    %v1765 = vmul.f32 %v1760, %v1764
    %v1766 = vmul.f32 %v1763, %v1764
    %v1767 = vsub.f32 %v1756, %v1765
    %v1768 = vsub.f32 %v1757, %v1766
    %v1769 = vmul.f32 %v1767, %v1767
    %v1770 = vmul.f32 %v1768, %v1768
    %v1771 = vsel %vm262, %v1769, 0.0
    %1772 = vadd.xlane.f32.xlu0 %v1771
    %v1773 = vpop.xlane.xlu0 %1772
    %v1774 = vsel %vm262, %v1770, 0.0
    %1775 = vadd.xlane.f32.xlu0 %v1774
    %v1776 = vpop.xlane.xlu0 %1775
    %v1777 = vmul.f32 %v1773, %v1764
    %v1778 = vmul.f32 %v1776, %v1764
    %v1779 = vadd.f32 %v1777, 1e-05
    %v1780 = vadd.f32 %v1778, 1e-05
    %v1781 = vrsqrt.pop %v1779
    %v1782 = vrsqrt.pop %v1780
    %v1783 = vmul.f32 %v1767, %v1781
    %v1784 = vmul.f32 %v1768, %v1782
    %v1785 = vld [vmem:[%s71] sm:$0x1]
    %v1787 = vlaneseq
    %v1788 = vshrl.u32 %v1787, 7
    %v1789 = vsub.s32 0, %v1788
    %v1790 = vrot.slane %v1785, %v1789
    %v1792 = vmul.f32 %v1783, %v1790
    %v1793 = vmul.f32 %v1784, %v1790
    %v1794 = vld [vmem:[%s73] sm:$0x1]
    %v1796 = vlaneseq
    %v1797 = vshrl.u32 %v1796, 7
    %v1798 = vsub.s32 0, %v1797
    %v1799 = vrot.slane %v1794, %v1798
    %v1801 = vadd.f32 %v1792, %v1799
    %v1802 = vadd.f32 %v1793, %v1799
    %v1803 = vmul.f32 %v1801, %v1801
    %v1804 = vmul.f32 %v1802, %v1802
    %v1805 = vmul.f32 %v1801, %v1803
    %v1806 = vmul.f32 %v1802, %v1804
    %v1807 = vmul.f32 %v1805, 0.044715
    %v1808 = vmul.f32 %v1806, 0.044715
    %v1809 = vadd.f32 %v1801, %v1807
    %v1810 = vadd.f32 %v1802, %v1808
    %v1811 = vmul.f32 %v1809, 0.7978846
    %v1812 = vmul.f32 %v1810, 0.7978846
    %v1813 = vtanh.pop %v1811
    %v1814 = vtanh.pop %v1812
    %v1815 = vadd.f32 %v1813, 1.0
    %v1816 = vadd.f32 %v1814, 1.0
    %v1817 = vmul.f32 %v1815, 0.5
    %v1818 = vmul.f32 %v1816, 0.5
    %v1819 = vmul.f32 %v1801, %v1817
    %v1820 = vmul.f32 %v1802, %v1818
    %v1821 = vld [vmem:[%s75] sm:$0xff]
    %v1822 = vld [vmem:[%s75 + $0x8] sm:$0xff]
    %v1823 = vld [vmem:[%s77] sm:$0x1]
    %v1825 = vlaneseq
    %v1826 = vshrl.u32 %v1825, 7
    %v1827 = vsub.s32 0, %v1826
    %v1828 = vrot.slane %v1823, %v1827
    %v1831 = vsel %vm262, %v1819, 0
    %v1834 = vsel %vm262, %v1820, 0
    %1836 = vmatprep.subr.mxu0 0.0
    %1837 = vmatpush1.msra.mxu0 %v1821
    %1838 = vmatprep.subr.mxu0 0.0
    %1839 = vmatpush1.msra.mxu0 %v1822
    %1840 = vmatprep.subr.mxu0 0.0
    %1841 = vmatpush1.msra.mxu0 0.0
    %1842 = vmatprep.subr.mxu0 0.0
    %1843 = vmatpush1.msra.mxu0 0.0
    %1844 = vmatprep.subr.mxu0 0.0
    %1845 = vmatpush1.msra.mxu0 0.0
    %1846 = vmatprep.subr.mxu0 0.0
    %1847 = vmatpush1.msra.mxu0 0.0
    %1848 = vmatprep.subr.mxu0 0.0
    %1849 = vmatpush1.msra.mxu0 0.0
    %1850 = vmatprep.subr.mxu0 0.0
    %1851 = vmatpush1.msra.mxu0 0.0
    %1852 = vmatprep.subr.mxu0 0.0
    %1853 = vmatpush1.msra.mxu0 0.0
    %1854 = vmatprep.subr.mxu0 0.0
    %1855 = vmatpush1.msra.mxu0 0.0
    %1856 = vmatprep.subr.mxu0 0.0
    %1857 = vmatpush1.msra.mxu0 0.0
    %1858 = vmatprep.subr.mxu0 0.0
    %1859 = vmatpush1.msra.mxu0 0.0
    %1860 = vmatprep.subr.mxu0 0.0
    %1861 = vmatpush1.msra.mxu0 0.0
    %1862 = vmatprep.subr.mxu0 0.0
    %1863 = vmatpush1.msra.mxu0 0.0
    %1864 = vmatprep.subr.mxu0 0.0
    %1865 = vmatpush1.msra.mxu0 0.0
    %1866 = vmatprep.subr.mxu0 0.0
    %1867 = vmatpush1.msra.mxu0 0.0
    %1868 = vmatprep.subr.mxu0 0.0
    %1869 = vmatpush1.msra.mxu0 0.0
    %1870 = vmatprep.subr.mxu0 0.0
    %1871 = vmatpush1.msra.mxu0 0.0
    %1872 = vmatprep.subr.mxu0 0.0
    %1873 = vmatpush1.msra.mxu0 0.0
    %1874 = vmatprep.subr.mxu0 0.0
    %1875 = vmatpush1.msra.mxu0 0.0
    %1876 = vmatprep.subr.mxu0 0.0
    %1877 = vmatpush1.msra.mxu0 0.0
    %1878 = vmatprep.subr.mxu0 0.0
    %1879 = vmatpush1.msra.mxu0 0.0
    %1880 = vmatprep.subr.mxu0 0.0
    %1881 = vmatpush1.msra.mxu0 0.0
    %1882 = vmatprep.subr.mxu0 0.0
    %1883 = vmatpush1.msra.mxu0 0.0
    %1884 = vmatprep.subr.mxu0 0.0
    %1885 = vmatpush1.msra.mxu0 0.0
    %1886 = vmatprep.subr.mxu0 0.0
    %1887 = vmatpush1.msra.mxu0 0.0
    %1888 = vmatprep.subr.mxu0 0.0
    %1889 = vmatpush1.msra.mxu0 0.0
    %1890 = vmatprep.subr.mxu0 0.0
    %1891 = vmatpush1.msra.mxu0 0.0
    %1892 = vmatprep.subr.mxu0 0.0
    %1893 = vmatpush1.msra.mxu0 0.0
    %1894 = vmatprep.subr.mxu0 0.0
    %1895 = vmatpush1.msra.mxu0 0.0
    %1896 = vmatprep.subr.mxu0 0.0
    %1897 = vmatpush1.msra.mxu0 0.0
    %1898 = vmatprep.subr.mxu0 0.0
    %1899 = vmatpush1.msra.mxu0 0.0
    %1900 = vmatprep.mubr.f32.mxu0 0.0
    %1901 = vmatmul.mubr.f32.gmra.mrb[0].mxu0 %v1831
    %v1902 = vpop.f32.mrb[0].mxu0
    %v1903 = vadd.f32 %v1828, %v1902
    %v1904 = vpop.f32.mrb[0].mxu0
    %1905 = vmatprep.mubr.f32.mxu0 0.0
    %1906 = vmatmul.mubr.f32.gmra.mrb[0].mxu0 %v1834
    %v1907 = vpop.f32.mrb[0].mxu0
    %v1908 = vadd.f32 %v1828, %v1907
    %v1909 = vpop.f32.mrb[0].mxu0
    %1910 = vdwg.mxu0
    %s1911 = sld [smem:[#allocation2]]
    %v1912 = vstv %s1911
    %v1913 = vmul.f32 %v1912, %v1903
    %v1914 = vmul.f32 %v1912, %v1908
    %v1915 = vadd.f32 %v1585, %v1913
    %v1916 = vadd.f32 %v1590, %v1914
    %v1917 = vld [vmem:[%s3] sm:$0xff]
    %v1918 = vld [vmem:[%s3 + $0x8] sm:$0xff]
    %v1919 = vsub.f32 %v1399, %v1917
    %v1920 = vsub.f32 %v1404, %v1918
    %v1921 = vld [vmem:[%s5] sm:$0xff]
    %v1922 = vld [vmem:[%s5 + $0x8] sm:$0xff]
    %v1923 = vsub.f32 %v1915, %v1921
    %v1924 = vsub.f32 %v1916, %v1922
    %v1925 = vmul.f32 %v1919, %v1919
    %v1926 = vmul.f32 %v1920, %v1920
    %v1927 = vsel %vm743, %v1925, 0.0
    %v1928 = vsel %vm743, %v1926, 0.0
    %v1929 = vadd.f32 %v1927, %v1928
    %1930 = vadd.xlane.f32.xlu0 %v1929
    %v1931 = vpop.xlane.xlu0 %1930
    %v1932 = vrot.slane %v1931, 4
    %v1933 = vadd.f32 %v1931, %v1932
    %v1934 = vrot.slane %v1933, 2
    %v1935 = vadd.f32 %v1933, %v1934
    %v1936 = vrot.slane %v1935, 1
    %v1937 = vadd.f32 %v1935, %v1936
    %s1938 = vtos %v1937
    %v1939 = vstv %s1938
    %vm1940 = vcmask 0
    %1941 = vst.msk [vmem:[#allocation16] sm:$0x1] %vm1940, %v1939
    %v1942 = vmul.f32 %v1923, %v1923
    %v1943 = vmul.f32 %v1924, %v1924
    %v1944 = vsel %vm262, %v1942, 0.0
    %v1945 = vsel %vm262, %v1943, 0.0
    %v1946 = vadd.f32 %v1944, %v1945
    %1947 = vadd.xlane.f32.xlu0 %v1946
    %v1948 = vpop.xlane.xlu0 %1947
    %v1949 = vrot.slane %v1948, 4
    %v1950 = vadd.f32 %v1948, %v1949
    %v1951 = vrot.slane %v1950, 2
    %v1952 = vadd.f32 %v1950, %v1951
    %v1953 = vrot.slane %v1952, 1
    %v1954 = vadd.f32 %v1952, %v1953
    %s1955 = vtos %v1954
    %v1956 = vstv %s1955
    %1957 = vst.msk [vmem:[#allocation18] sm:$0x1] %vm1940, %v1956
    // Predicated region
    $region186: #{vq_forward.1} parent=1 // pred_check
      _
    $region187: #{vq_forward.1} parent=1 // pred_check_branch
      %1959 = sbr.rel (0) target = $region189
    $region188: #{vq_forward.1} parent=1 // pred_region
      %s1961 = ssub.s32 256, 256
      %1962 = vsyncadd [#allocation5], %s1961
      %s1963 = sshll.u32 [#allocation15], 4
      %s1964 = int_to_ptr.vmem [resolvable:$true] %s1963
      %1969 = dma.vmem_to_hbm [thread:$0]  %s1964, 256, %s79, [#allocation5], 128, 128, 8
    $region189: #{vq_forward.1} parent=1 // pred_fallthru
      _
    // Predicated region
    $region190: #{vq_forward.1} parent=1 // pred_check
      _
    $region191: #{vq_forward.1} parent=1 // pred_check_branch
      %1971 = sbr.rel (0) target = $region193
    $region192: #{vq_forward.1} parent=1 // pred_region
      %s1973 = ssub.s32 16, 16
      %1974 = vsyncadd [#allocation17], %s1973
      %s1976 = sshll.u32 [#allocation16], 4
      %s1977 = int_to_ptr.vmem [resolvable:$true] %s1976
      %1979 = dma.vmem_to_hbm [thread:$0]  %s1977, 16, %s81, [#allocation17]
    $region193: #{vq_forward.1} parent=1 // pred_fallthru
      _
    // Predicated region
    $region194: #{vq_forward.1} parent=1 // pred_check
      _
    $region195: #{vq_forward.1} parent=1 // pred_check_branch
      %1981 = sbr.rel (0) target = $region197
    $region196: #{vq_forward.1} parent=1 // pred_region
      %s1983 = ssub.s32 16, 16
      %1984 = vsyncadd [#allocation17], %s1983
      %s1986 = sshll.u32 [#allocation18], 4
      %s1987 = int_to_ptr.vmem [resolvable:$true] %s1986
      %1989 = dma.vmem_to_hbm [thread:$0]  %s1987, 16, %s83, [#allocation17]
    $region197: #{vq_forward.1} parent=1 // pred_fallthru
      _
    // Predicated region
    $region198: #{vq_forward.1} parent=1 // pred_check
      _
    $region199: #{vq_forward.1} parent=1 // pred_check_branch
      %1991 = sbr.rel (0) target = $region201
    $region200: #{vq_forward.1} parent=1 // pred_region
      %1992 = dma.done [#allocation5], 256
    $region201: #{vq_forward.1} parent=1 // pred_fallthru
      _
    // Predicated region
    $region202: #{vq_forward.1} parent=1 // pred_check
      _
    $region203: #{vq_forward.1} parent=1 // pred_check_branch
      %1994 = sbr.rel (0) target = $region205
    $region204: #{vq_forward.1} parent=1 // pred_region
      %1995 = dma.done [#allocation17], 16
    $region205: #{vq_forward.1} parent=1 // pred_fallthru
      _
    // Predicated region
    $region206: #{vq_forward.1} parent=1 // pred_check
      _
    $region207: #{vq_forward.1} parent=1 // pred_check_branch
      %1997 = sbr.rel (0) target = $region209
    $region208: #{vq_forward.1} parent=1 // pred_region
      %1998 = dma.done [#allocation17], 16
    $region209: #{vq_forward.1} parent=1 // pred_fallthru
      _
    %1999 = vsyncpa [#allocation4], 1
    %2000 = vsyncpa [#allocation7], 1
    %2001 = vsyncpa [#allocation10], 1
    %2002 = vsyncpa [#allocation13], 1
    %2003 = vsyncpa [#allocation5], 1
    %2004 = vsyncpa [#allocation17], 1

</llo_original>
